<compile_context>
chip_gen: v5e
topology: v5e:2x2
jax: 0.10.0
libtpu: 0.0.40
codegen_flags: <defaults>
</compile_context>

<pallas_src>
import functools

import jax
import jax.numpy as jnp
from jax.experimental import pallas as pl
from jax.experimental.pallas import tpu as pltpu


# ----------------------------- Pallas kernel -------------------------------

def _double_conv_kernel(x2_ref, x1_ref, masks_ref,
                        w1_ref, g1_ref, b1_ref,
                        w2_ref, g2_ref, b2_ref,
                        o_ref, xbuf_ref, y1_ref,
                        *, N, H, W, PAD, CA, CB):
    """Fused [3x3 conv + train-mode BN + ReLU] x 2, channel-major bf16 MXU path.

    x2_ref  : (CA, M) bf16   skip-connection activations, channel-major, M=N*H*W
    x1_ref  : (CB, M) bf16   upsampled activations, channel-major
    masks_ref: (4, M) f32    rows: [dw=-1 valid, dw=+1 valid, dh=-1 valid, dh=+1 valid]
    w*_ref  : (3, Co, 3*Ci) bf16  conv weights grouped by dh; dw-major Ci blocks
    g*/b*   : (Co, 1) f32    BN gamma / beta
    o_ref   : (Co2, M) f32   lane-dense output
    xbuf_ref: (CA+CB, PAD+M+PAD) bf16 VMEM staging (in-kernel channel concat)
    y1_ref  : (Co1,  PAD+M+PAD) bf16 VMEM scratch holding the stage-1 result
    """
    M = N * H * W
    C1 = CA + CB
    Co1 = y1_ref.shape[0]

    # Boundary masks (precomputed in the wrapper).  bf16 copies feed the tap
    # multiplies; f32 rows are used for the post-dot h-boundary mask.
    wv = (masks_ref[0:1, :].astype(jnp.bfloat16),      # dw = -1 valid
          masks_ref[1:2, :].astype(jnp.bfloat16))      # dw = +1 valid
    hv = (masks_ref[2:3, :], None, masks_ref[3:4, :])  # dh = -1 / 0 / +1 (f32)

    # Stage the channel concat once in VMEM (no HBM concat round-trip); only
    # the two lane-pad strips are zero-filled, the interior is overwritten.
    zpad_x = jnp.zeros((C1, PAD), jnp.bfloat16)
    xbuf_ref[:, :PAD] = zpad_x
    xbuf_ref[:, PAD + M:] = zpad_x
    xbuf_ref[:CA, PAD:PAD + M] = x2_ref[...]
    xbuf_ref[CA:, PAD:PAD + M] = x1_ref[...]

    def conv3x3(buf_ref, w_ref):
        # One fat dot per dh-group (K = 3*C): the three dw taps are stacked on
        # the contraction axis so tap accumulation happens inside the MXU.
        # The shared h-boundary mask goes on the (Co, M) result; the per-dw
        # w-boundary masks go on the (C, M) taps; the center tap is unmasked.
        acc = None
        for g, dh in enumerate((-1, 0, 1)):
            base = PAD + dh * W
            t_m1 = buf_ref[:, base - 1:base - 1 + M] * wv[0]
            t_00 = buf_ref[:, base:base + M]
            t_p1 = buf_ref[:, base + 1:base + 1 + M] * wv[1]
            taps = jnp.concatenate([t_m1, t_00, t_p1], axis=0)     # (3C, M) bf16
            part = jnp.dot(w_ref[g], taps,                         # (Co, M) f32
                           preferred_element_type=jnp.float32)
            if hv[g] is not None:
                part = part * hv[g]
            acc = part if acc is None else acc + part
        return acc

    def bn_relu(acc, g_ref, b_ref):
        # Training-mode BatchNorm folded to scale/shift.  Two-pass statistics
        # (mean, then centered variance) — avoids E[x^2]-mean^2 cancellation.
        inv_m = jnp.float32(1.0 / M)
        mean = jnp.sum(acc, axis=1, keepdims=True) * inv_m          # (Co, 1)
        cen = acc - mean
        var = jnp.sum(cen * cen, axis=1, keepdims=True) * inv_m
        scale = g_ref[...] * jax.lax.rsqrt(var + jnp.float32(1e-5))
        return jnp.maximum(cen * scale + b_ref[...], 0.0)

    # Stage 1 (conv bias intentionally omitted: cancelled by BN mean-subtract).
    y1 = bn_relu(conv3x3(xbuf_ref, w1_ref), g1_ref, b1_ref)         # (Co1, M) f32

    # Keep y1 VMEM-resident in bf16 for the stage-2 MXU taps; zero only pads.
    zpad_y = jnp.zeros((Co1, PAD), jnp.bfloat16)
    y1_ref[:, :PAD] = zpad_y
    y1_ref[:, PAD + M:] = zpad_y
    y1_ref[:, PAD:PAD + M] = y1.astype(jnp.bfloat16)

    # Stage 2.
    y2 = bn_relu(conv3x3(y1_ref, w2_ref), g2_ref, b2_ref)           # (Co2, M)
    o_ref[...] = y2.astype(o_ref.dtype)


def double_conv_bn_relu(x2_cm, x1_cm, masks, w1g, g1, be1, w2g, g2, be2,
                        *, N, H, W, PAD):
    M = N * H * W
    CA, CB = x2_cm.shape[0], x1_cm.shape[0]
    Co1, Co2 = w1g.shape[1], w2g.shape[1]
    vmem = pl.BlockSpec(memory_space=pltpu.MemorySpace.VMEM)
    kernel = functools.partial(_double_conv_kernel, N=N, H=H, W=W, PAD=PAD,
                               CA=CA, CB=CB)
    return pl.pallas_call(
        kernel,
        out_shape=jax.ShapeDtypeStruct((Co2, M), jnp.float32),
        in_specs=[vmem] * 9,
        out_specs=vmem,
        scratch_shapes=[pltpu.VMEM((CA + CB, M + 2 * PAD), jnp.bfloat16),
                        pltpu.VMEM((Co1, M + 2 * PAD), jnp.bfloat16)],
    )(x2_cm, x1_cm, masks,
      w1g, g1.reshape(Co1, 1), be1.reshape(Co1, 1),
      w2g, g2.reshape(Co2, 1), be2.reshape(Co2, 1))


# ------------------------------ JAX glue ------------------------------------

def upsample_bilinear_x2_align_corners(x):
    """x: (N, C, H, W) -> (N, C, 2H, 2W); matches torch.nn.Upsample(
    scale_factor=2, mode='bilinear', align_corners=True)."""
    # TODO(synk): gather-based bilinear interpolation kept as plain XLA glue.
    N, C, H, W = x.shape
    OH, OW = 2 * H, 2 * W

    def coords(in_size, out_size):
        if in_size == 1 or out_size == 1:
            return jnp.zeros((out_size,), jnp.float32)
        return jnp.arange(out_size, dtype=jnp.float32) * (in_size - 1) / (out_size - 1)

    ys, xs = coords(H, OH), coords(W, OW)
    y0 = jnp.floor(ys).astype(jnp.int32)
    y1 = jnp.minimum(y0 + 1, H - 1)
    x0 = jnp.floor(xs).astype(jnp.int32)
    x1 = jnp.minimum(x0 + 1, W - 1)
    wy = (ys - y0.astype(jnp.float32))[None, None, :, None]
    wx = (xs - x0.astype(jnp.float32))[None, None, None, :]
    rows = x[:, :, y0, :] * (1.0 - wy) + x[:, :, y1, :] * wy
    return rows[:, :, :, x0] * (1.0 - wx) + rows[:, :, :, x1] * wx


def make_boundary_masks(N, H, W):
    """(4, M) f32: rows [dw=-1 valid, dw=+1 valid, dh=-1 valid, dh=+1 valid].
    Computed on constants -> folded by XLA, never recomputed in the kernel."""
    M = N * H * W
    col = jnp.arange(M, dtype=jnp.int32)
    hh = (col // W) % H
    ww = col % W
    return jnp.stack([ww >= 1, ww < W - 1, hh >= 1, hh < H - 1]).astype(jnp.float32)


def weight_to_groups(w_oihw):
    """(Co, Ci, 3, 3) torch layout -> (3, Co, 3*Ci) bf16.
    Axis 0 = kh (dh group); within each group the contraction columns are
    dw-major blocks of Ci (column index = kw*Ci + ci)."""
    Co, Ci, _, _ = w_oihw.shape
    return jnp.transpose(w_oihw, (2, 0, 3, 1)).reshape(3, Co, 3 * Ci).astype(jnp.bfloat16)


def up_forward(x1_nchw, x2_nchw, p):
    """Pallas-backed Up.forward. Inputs/outputs are NCHW like PyTorch."""
    x1 = upsample_bilinear_x2_align_corners(x1_nchw)
    dy = x2_nchw.shape[2] - x1.shape[2]
    dx = x2_nchw.shape[3] - x1.shape[3]
    x1 = jnp.pad(x1, ((0, 0), (0, 0),
                      (dy // 2, dy - dy // 2),
                      (dx // 2, dx - dx // 2)))

    Nb, CA, H, W = x2_nchw.shape
    CB = x1.shape[1]
    M = Nb * H * W
    PAD = ((W + 1 + 127) // 128) * 128        # lane padding, >= W+1, 128-aligned

    # Channel-major lane-dense layout, bf16 to feed the MXU and halve HBM DMA.
    # The channel concat (torch.cat([x2, x1], dim=1)) happens inside the
    # kernel's VMEM staging buffer — no HBM write+read of the concatenation.
    x2_cm = jnp.transpose(x2_nchw, (1, 0, 2, 3)).reshape(CA, M).astype(jnp.bfloat16)
    x1_cm = jnp.transpose(x1, (1, 0, 2, 3)).reshape(CB, M).astype(jnp.bfloat16)
    masks = make_boundary_masks(Nb, H, W)

    y = double_conv_bn_relu(x2_cm, x1_cm, masks,
                            p["w1g"], p["g1"], p["be1"],
                            p["w2g"], p["g2"], p["be2"],
                            N=Nb, H=H, W=W, PAD=PAD)
    Co = y.shape[0]
    return jnp.transpose(y.reshape(Co, Nb, H, W), (1, 0, 2, 3))     # back to NCHW


# --------------------------- pure-JAX reference ------------------------------

def reference_up(x1_nchw, x2_nchw, p):
    x1 = upsample_bilinear_x2_align_corners(x1_nchw)
    dy = x2_nchw.shape[2] - x1.shape[2]
    dx = x2_nchw.shape[3] - x1.shape[3]
    x1 = jnp.pad(x1, ((0, 0), (0, 0),
                      (dy // 2, dy - dy // 2),
                      (dx // 2, dx - dx // 2)))
    x = jnp.concatenate([x2_nchw, x1], axis=1)

    def cbr(x, w, b, g, be):
        y = jax.lax.conv_general_dilated(
            x, w, (1, 1), ((1, 1), (1, 1)),
            dimension_numbers=("NCHW", "OIHW", "NCHW"),
            precision=jax.lax.Precision.HIGHEST)
        y = y + b[None, :, None, None]
        m = jnp.mean(y, axis=(0, 2, 3), keepdims=True)
        v = jnp.mean((y - m) ** 2, axis=(0, 2, 3), keepdims=True)
        y = (y - m) * jax.lax.rsqrt(v + 1e-5)
        y = y * g[None, :, None, None] + be[None, :, None, None]
        return jnp.maximum(y, 0.0)

    x = cbr(x, p["w1"], p["b1"], p["g1"], p["be1"])
    x = cbr(x, p["w2"], p["b2"], p["g2"], p["be2"])
    return x


# --------------------------------- main --------------------------------------

def init_params(key, in_ch, out_ch):
    ks = jax.random.split(key, 8)
    w1 = 0.1 * jax.random.normal(ks[0], (out_ch, in_ch, 3, 3), jnp.float32)
    b1 = 0.1 * jax.random.normal(ks[1], (out_ch,), jnp.float32)
    g1 = 1.0 + 0.1 * jax.random.normal(ks[2], (out_ch,), jnp.float32)
    be1 = 0.1 * jax.random.normal(ks[3], (out_ch,), jnp.float32)
    w2 = 0.1 * jax.random.normal(ks[4], (out_ch, out_ch, 3, 3), jnp.float32)
    b2 = 0.1 * jax.random.normal(ks[5], (out_ch,), jnp.float32)
    g2 = 1.0 + 0.1 * jax.random.normal(ks[6], (out_ch,), jnp.float32)
    be2 = 0.1 * jax.random.normal(ks[7], (out_ch,), jnp.float32)
    return {
        # reference (torch-layout) f32 params; conv biases are only used by the
        # reference — inside the kernel they are exactly cancelled by BN.
        "w1": w1, "b1": b1, "g1": g1, "be1": be1,
        "w2": w2, "b2": b2, "g2": g2, "be2": be2,
        # kernel-layout dh-grouped bf16 weights
        "w1g": weight_to_groups(w1), "w2g": weight_to_groups(w2),
    }


if __name__ == "__main__":
    key = jax.random.PRNGKey(0)
    k_x1, k_x2, k_p = jax.random.split(key, 3)

    in_channels, out_channels = 8, 4
    # UNet decoder stage: x1 is the lower-resolution feature map, x2 the skip.
    x1 = jax.random.normal(k_x1, (2, 4, 8, 8), jnp.float32)      # NCHW
    x2 = jax.random.normal(k_x2, (2, 4, 16, 16), jnp.float32)    # NCHW

    params = init_params(k_p, in_channels, out_channels)

    fwd = jax.jit(lambda a, b: up_forward(a, b, params))
    out = jax.block_until_ready(fwd(x1, x2))
    assert out.shape == (2, out_channels, 16, 16), out.shape

    ref = jax.block_until_ready(reference_up(x1, x2, params))
    diff = jnp.abs(out - ref)
    max_diff = float(jnp.max(diff))
    rms_diff = float(jnp.sqrt(jnp.mean(diff * diff)))
    # bf16 MXU inputs vs the f32 HIGHEST-precision reference: expect ~1e-2
    # level absolute error after BN normalization.
    assert max_diff < 8e-2 and rms_diff < 2e-2, (max_diff, rms_diff)

    print("KERNEL_OK")
</pallas_src>

<mosaic_0001>
module attributes {stable_mosaic.version = 11 : i64} {
  func.func @_double_conv_kernel(%arg0: memref<4x512xbf16, #tpu.memory_space<vmem>>, %arg1: memref<4x512xbf16, #tpu.memory_space<vmem>>, %arg2: memref<4x512xf32, #tpu.memory_space<vmem>>, %arg3: memref<3x4x24xbf16, #tpu.memory_space<vmem>>, %arg4: memref<4x1xf32, #tpu.memory_space<vmem>>, %arg5: memref<4x1xf32, #tpu.memory_space<vmem>>, %arg6: memref<3x4x12xbf16, #tpu.memory_space<vmem>>, %arg7: memref<4x1xf32, #tpu.memory_space<vmem>>, %arg8: memref<4x1xf32, #tpu.memory_space<vmem>>, %arg9: memref<4x512xf32, #tpu.memory_space<vmem>>, %arg10: memref<8x768xbf16, #tpu.memory_space<vmem>>, %arg11: memref<4x768xbf16, #tpu.memory_space<vmem>>) attributes {dimension_semantics = [], scalar_prefetch = 0 : i64, scratch_operands = 2 : i64, tpu.core_type = #tpu.core_type<tc>} {
    %c0 = arith.constant 0 : index
    %c0_0 = arith.constant 0 : index
    %0 = vector.load %arg2[%c0, %c0_0] : memref<4x512xf32, #tpu.memory_space<vmem>>, vector<1x512xf32>
    %1 = arith.truncf %0 : vector<1x512xf32> to vector<1x512xbf16>
    %c1 = arith.constant 1 : index
    %c0_1 = arith.constant 0 : index
    %2 = vector.load %arg2[%c1, %c0_1] : memref<4x512xf32, #tpu.memory_space<vmem>>, vector<1x512xf32>
    %3 = arith.truncf %2 : vector<1x512xf32> to vector<1x512xbf16>
    %c2 = arith.constant 2 : index
    %c0_2 = arith.constant 0 : index
    %4 = vector.load %arg2[%c2, %c0_2] : memref<4x512xf32, #tpu.memory_space<vmem>>, vector<1x512xf32>
    %c3 = arith.constant 3 : index
    %c0_3 = arith.constant 0 : index
    %5 = vector.load %arg2[%c3, %c0_3] : memref<4x512xf32, #tpu.memory_space<vmem>>, vector<1x512xf32>
    %cst = arith.constant 0.000000e+00 : bf16
    %6 = vector.broadcast %cst : bf16 to vector<8x128xbf16>
    %c0_4 = arith.constant 0 : index
    %c0_5 = arith.constant 0 : index
    %7 = vector.load %arg10[%c0_4, %c0_5] : memref<8x768xbf16, #tpu.memory_space<vmem>>, vector<8x128xbf16>
    tpu.vector_store %arg10[%c0_4, %c0_5], %6 {strides = array<i32>} : memref<8x768xbf16, #tpu.memory_space<vmem>>, vector<8x128xbf16>,
    %c0_6 = arith.constant 0 : index
    %c640 = arith.constant 640 : index
    %8 = vector.load %arg10[%c0_6, %c640] : memref<8x768xbf16, #tpu.memory_space<vmem>>, vector<8x128xbf16>
    tpu.vector_store %arg10[%c0_6, %c640], %6 {strides = array<i32>} : memref<8x768xbf16, #tpu.memory_space<vmem>>, vector<8x128xbf16>,
    %c0_7 = arith.constant 0 : index
    %c0_8 = arith.constant 0 : index
    %9 = vector.load %arg0[%c0_7, %c0_8] : memref<4x512xbf16, #tpu.memory_space<vmem>>, vector<4x512xbf16>
    %c0_9 = arith.constant 0 : index
    %c128 = arith.constant 128 : index
    %10 = vector.load %arg10[%c0_9, %c128] : memref<8x768xbf16, #tpu.memory_space<vmem>>, vector<4x512xbf16>
    tpu.vector_store %arg10[%c0_9, %c128], %9 {strides = array<i32>} : memref<8x768xbf16, #tpu.memory_space<vmem>>, vector<4x512xbf16>,
    %c0_10 = arith.constant 0 : index
    %c0_11 = arith.constant 0 : index
    %11 = vector.load %arg1[%c0_10, %c0_11] : memref<4x512xbf16, #tpu.memory_space<vmem>>, vector<4x512xbf16>
    %c4 = arith.constant 4 : index
    %c128_12 = arith.constant 128 : index
    %12 = vector.load %arg10[%c4, %c128_12] : memref<8x768xbf16, #tpu.memory_space<vmem>>, vector<4x512xbf16>
    tpu.vector_store %arg10[%c4, %c128_12], %11 {strides = array<i32>} : memref<8x768xbf16, #tpu.memory_space<vmem>>, vector<4x512xbf16>,
    %c0_13 = arith.constant 0 : index
    %c111 = arith.constant 111 : index
    %13 = vector.load %arg10[%c0_13, %c111] : memref<8x768xbf16, #tpu.memory_space<vmem>>, vector<8x512xbf16>
    %14 = vector.broadcast %1 : vector<1x512xbf16> to vector<8x512xbf16>
    %15 = arith.mulf %13, %14 : vector<8x512xbf16>
    %c0_14 = arith.constant 0 : index
    %c112 = arith.constant 112 : index
    %16 = vector.load %arg10[%c0_14, %c112] : memref<8x768xbf16, #tpu.memory_space<vmem>>, vector<8x512xbf16>
    %c0_15 = arith.constant 0 : index
    %c113 = arith.constant 113 : index
    %17 = vector.load %arg10[%c0_15, %c113] : memref<8x768xbf16, #tpu.memory_space<vmem>>, vector<8x512xbf16>
    %18 = vector.broadcast %3 : vector<1x512xbf16> to vector<8x512xbf16>
    %19 = arith.mulf %17, %18 : vector<8x512xbf16>
    %20 = tpu.concatenate %15, %16, %19 in 0 : vector<8x512xbf16>, vector<8x512xbf16>, vector<8x512xbf16> -> vector<24x512xbf16>
    %c0_16 = arith.constant 0 : index
    %c0_17 = arith.constant 0 : index
    %c0_18 = arith.constant 0 : index
    %21 = vector.load %arg3[%c0_16, %c0_17, %c0_18] : memref<3x4x24xbf16, #tpu.memory_space<vmem>>, vector<1x4x24xbf16>
    %22 = vector.shape_cast %21 : vector<1x4x24xbf16> to vector<4x24xbf16>
    %cst_19 = arith.constant dense<0.000000e+00> : vector<4x512xf32>
    %23 = tpu.matmul %22, %20, %cst_19 {dimension_numbers = #tpu.dot_dimension_numbers<[1], [0], [0], [1], [0, 0, 1, 1], [], []>} : vector<4x24xbf16>, vector<24x512xbf16>, vector<4x512xf32> -> vector<4x512xf32>
    %24 = vector.broadcast %4 : vector<1x512xf32> to vector<4x512xf32>
    %25 = arith.mulf %23, %24 : vector<4x512xf32>
    %c0_20 = arith.constant 0 : index
    %c127 = arith.constant 127 : index
    %26 = vector.load %arg10[%c0_20, %c127] : memref<8x768xbf16, #tpu.memory_space<vmem>>, vector<8x512xbf16>
    %27 = vector.broadcast %1 : vector<1x512xbf16> to vector<8x512xbf16>
    %28 = arith.mulf %26, %27 : vector<8x512xbf16>
    %c0_21 = arith.constant 0 : index
    %c128_22 = arith.constant 128 : index
    %29 = vector.load %arg10[%c0_21, %c128_22] : memref<8x768xbf16, #tpu.memory_space<vmem>>, vector<8x512xbf16>
    %c0_23 = arith.constant 0 : index
    %c129 = arith.constant 129 : index
    %30 = vector.load %arg10[%c0_23, %c129] : memref<8x768xbf16, #tpu.memory_space<vmem>>, vector<8x512xbf16>
    %31 = vector.broadcast %3 : vector<1x512xbf16> to vector<8x512xbf16>
    %32 = arith.mulf %30, %31 : vector<8x512xbf16>
    %33 = tpu.concatenate %28, %29, %32 in 0 : vector<8x512xbf16>, vector<8x512xbf16>, vector<8x512xbf16> -> vector<24x512xbf16>
    %c1_24 = arith.constant 1 : index
    %c0_25 = arith.constant 0 : index
    %c0_26 = arith.constant 0 : index
    %34 = vector.load %arg3[%c1_24, %c0_25, %c0_26] : memref<3x4x24xbf16, #tpu.memory_space<vmem>>, vector<1x4x24xbf16>
    %35 = vector.shape_cast %34 : vector<1x4x24xbf16> to vector<4x24xbf16>
    %cst_27 = arith.constant dense<0.000000e+00> : vector<4x512xf32>
    %36 = tpu.matmul %35, %33, %cst_27 {dimension_numbers = #tpu.dot_dimension_numbers<[1], [0], [0], [1], [0, 0, 1, 1], [], []>} : vector<4x24xbf16>, vector<24x512xbf16>, vector<4x512xf32> -> vector<4x512xf32>
    %37 = arith.addf %25, %36 : vector<4x512xf32>
    %c0_28 = arith.constant 0 : index
    %c143 = arith.constant 143 : index
    %38 = vector.load %arg10[%c0_28, %c143] : memref<8x768xbf16, #tpu.memory_space<vmem>>, vector<8x512xbf16>
    %39 = vector.broadcast %1 : vector<1x512xbf16> to vector<8x512xbf16>
    %40 = arith.mulf %38, %39 : vector<8x512xbf16>
    %c0_29 = arith.constant 0 : index
    %c144 = arith.constant 144 : index
    %41 = vector.load %arg10[%c0_29, %c144] : memref<8x768xbf16, #tpu.memory_space<vmem>>, vector<8x512xbf16>
    %c0_30 = arith.constant 0 : index
    %c145 = arith.constant 145 : index
    %42 = vector.load %arg10[%c0_30, %c145] : memref<8x768xbf16, #tpu.memory_space<vmem>>, vector<8x512xbf16>
    %43 = vector.broadcast %3 : vector<1x512xbf16> to vector<8x512xbf16>
    %44 = arith.mulf %42, %43 : vector<8x512xbf16>
    %45 = tpu.concatenate %40, %41, %44 in 0 : vector<8x512xbf16>, vector<8x512xbf16>, vector<8x512xbf16> -> vector<24x512xbf16>
    %c2_31 = arith.constant 2 : index
    %c0_32 = arith.constant 0 : index
    %c0_33 = arith.constant 0 : index
    %46 = vector.load %arg3[%c2_31, %c0_32, %c0_33] : memref<3x4x24xbf16, #tpu.memory_space<vmem>>, vector<1x4x24xbf16>
    %47 = vector.shape_cast %46 : vector<1x4x24xbf16> to vector<4x24xbf16>
    %cst_34 = arith.constant dense<0.000000e+00> : vector<4x512xf32>
    %48 = tpu.matmul %47, %45, %cst_34 {dimension_numbers = #tpu.dot_dimension_numbers<[1], [0], [0], [1], [0, 0, 1, 1], [], []>} : vector<4x24xbf16>, vector<24x512xbf16>, vector<4x512xf32> -> vector<4x512xf32>
    %49 = vector.broadcast %5 : vector<1x512xf32> to vector<4x512xf32>
    %50 = arith.mulf %48, %49 : vector<4x512xf32>
    %51 = arith.addf %37, %50 : vector<4x512xf32>
    %cst_35 = arith.constant dense<0.000000e+00> : vector<4xf32>
    %52 = vector.multi_reduction <add>, %51, %cst_35 [1] : vector<4x512xf32> to vector<4xf32>
    %53 = vector.shape_cast %52 : vector<4xf32> to vector<4x1xf32>
    %cst_36 = arith.constant 0.001953125 : f32
    %54 = vector.broadcast %cst_36 : f32 to vector<4x1xf32>
    %55 = arith.mulf %53, %54 : vector<4x1xf32>
    %56 = vector.broadcast %55 : vector<4x1xf32> to vector<4x512xf32>
    %57 = arith.subf %51, %56 : vector<4x512xf32>
    %58 = arith.mulf %57, %57 : vector<4x512xf32>
    %cst_37 = arith.constant dense<0.000000e+00> : vector<4xf32>
    %59 = vector.multi_reduction <add>, %58, %cst_37 [1] : vector<4x512xf32> to vector<4xf32>
    %60 = vector.shape_cast %59 : vector<4xf32> to vector<4x1xf32>
    %cst_38 = arith.constant 0.001953125 : f32
    %61 = vector.broadcast %cst_38 : f32 to vector<4x1xf32>
    %62 = arith.mulf %60, %61 : vector<4x1xf32>
    %c0_39 = arith.constant 0 : index
    %c0_40 = arith.constant 0 : index
    %63 = vector.load %arg4[%c0_39, %c0_40] : memref<4x1xf32, #tpu.memory_space<vmem>>, vector<4x1xf32>
    %cst_41 = arith.constant 9.99999974E-6 : f32
    %64 = vector.broadcast %cst_41 : f32 to vector<4x1xf32>
    %65 = arith.addf %62, %64 : vector<4x1xf32>
    %66 = math.rsqrt %65 : vector<4x1xf32>
    %67 = arith.mulf %63, %66 : vector<4x1xf32>
    %68 = vector.broadcast %67 : vector<4x1xf32> to vector<4x512xf32>
    %69 = arith.mulf %57, %68 : vector<4x512xf32>
    %c0_42 = arith.constant 0 : index
    %c0_43 = arith.constant 0 : index
    %70 = vector.load %arg5[%c0_42, %c0_43] : memref<4x1xf32, #tpu.memory_space<vmem>>, vector<4x1xf32>
    %71 = vector.broadcast %70 : vector<4x1xf32> to vector<4x512xf32>
    %72 = arith.addf %69, %71 : vector<4x512xf32>
    %cst_44 = arith.constant 0.000000e+00 : f32
    %73 = vector.broadcast %cst_44 : f32 to vector<4x512xf32>
    %74 = arith.maximumf %72, %73 : vector<4x512xf32>
    %cst_45 = arith.constant 0.000000e+00 : bf16
    %75 = vector.broadcast %cst_45 : bf16 to vector<4x128xbf16>
    %c0_46 = arith.constant 0 : index
    %c0_47 = arith.constant 0 : index
    %76 = vector.load %arg11[%c0_46, %c0_47] : memref<4x768xbf16, #tpu.memory_space<vmem>>, vector<4x128xbf16>
    tpu.vector_store %arg11[%c0_46, %c0_47], %75 {strides = array<i32>} : memref<4x768xbf16, #tpu.memory_space<vmem>>, vector<4x128xbf16>,
    %c0_48 = arith.constant 0 : index
    %c640_49 = arith.constant 640 : index
    %77 = vector.load %arg11[%c0_48, %c640_49] : memref<4x768xbf16, #tpu.memory_space<vmem>>, vector<4x128xbf16>
    tpu.vector_store %arg11[%c0_48, %c640_49], %75 {strides = array<i32>} : memref<4x768xbf16, #tpu.memory_space<vmem>>, vector<4x128xbf16>,
    %78 = arith.truncf %74 : vector<4x512xf32> to vector<4x512xbf16>
    %c0_50 = arith.constant 0 : index
    %c128_51 = arith.constant 128 : index
    %79 = vector.load %arg11[%c0_50, %c128_51] : memref<4x768xbf16, #tpu.memory_space<vmem>>, vector<4x512xbf16>
    tpu.vector_store %arg11[%c0_50, %c128_51], %78 {strides = array<i32>} : memref<4x768xbf16, #tpu.memory_space<vmem>>, vector<4x512xbf16>,
    %c0_52 = arith.constant 0 : index
    %c111_53 = arith.constant 111 : index
    %80 = vector.load %arg11[%c0_52, %c111_53] : memref<4x768xbf16, #tpu.memory_space<vmem>>, vector<4x512xbf16>
    %81 = vector.broadcast %1 : vector<1x512xbf16> to vector<4x512xbf16>
    %82 = arith.mulf %80, %81 : vector<4x512xbf16>
    %c0_54 = arith.constant 0 : index
    %c112_55 = arith.constant 112 : index
    %83 = vector.load %arg11[%c0_54, %c112_55] : memref<4x768xbf16, #tpu.memory_space<vmem>>, vector<4x512xbf16>
    %c0_56 = arith.constant 0 : index
    %c113_57 = arith.constant 113 : index
    %84 = vector.load %arg11[%c0_56, %c113_57] : memref<4x768xbf16, #tpu.memory_space<vmem>>, vector<4x512xbf16>
    %85 = vector.broadcast %3 : vector<1x512xbf16> to vector<4x512xbf16>
    %86 = arith.mulf %84, %85 : vector<4x512xbf16>
    %87 = tpu.concatenate %82, %83, %86 in 0 : vector<4x512xbf16>, vector<4x512xbf16>, vector<4x512xbf16> -> vector<12x512xbf16>
    %c0_58 = arith.constant 0 : index
    %c0_59 = arith.constant 0 : index
    %c0_60 = arith.constant 0 : index
    %88 = vector.load %arg6[%c0_58, %c0_59, %c0_60] : memref<3x4x12xbf16, #tpu.memory_space<vmem>>, vector<1x4x12xbf16>
    %89 = vector.shape_cast %88 : vector<1x4x12xbf16> to vector<4x12xbf16>
    %cst_61 = arith.constant dense<0.000000e+00> : vector<4x512xf32>
    %90 = tpu.matmul %89, %87, %cst_61 {dimension_numbers = #tpu.dot_dimension_numbers<[1], [0], [0], [1], [0, 0, 1, 1], [], []>} : vector<4x12xbf16>, vector<12x512xbf16>, vector<4x512xf32> -> vector<4x512xf32>
    %91 = vector.broadcast %4 : vector<1x512xf32> to vector<4x512xf32>
    %92 = arith.mulf %90, %91 : vector<4x512xf32>
    %c0_62 = arith.constant 0 : index
    %c127_63 = arith.constant 127 : index
    %93 = vector.load %arg11[%c0_62, %c127_63] : memref<4x768xbf16, #tpu.memory_space<vmem>>, vector<4x512xbf16>
    %94 = vector.broadcast %1 : vector<1x512xbf16> to vector<4x512xbf16>
    %95 = arith.mulf %93, %94 : vector<4x512xbf16>
    %c0_64 = arith.constant 0 : index
    %c128_65 = arith.constant 128 : index
    %96 = vector.load %arg11[%c0_64, %c128_65] : memref<4x768xbf16, #tpu.memory_space<vmem>>, vector<4x512xbf16>
    %c0_66 = arith.constant 0 : index
    %c129_67 = arith.constant 129 : index
    %97 = vector.load %arg11[%c0_66, %c129_67] : memref<4x768xbf16, #tpu.memory_space<vmem>>, vector<4x512xbf16>
    %98 = vector.broadcast %3 : vector<1x512xbf16> to vector<4x512xbf16>
    %99 = arith.mulf %97, %98 : vector<4x512xbf16>
    %100 = tpu.concatenate %95, %96, %99 in 0 : vector<4x512xbf16>, vector<4x512xbf16>, vector<4x512xbf16> -> vector<12x512xbf16>
    %c1_68 = arith.constant 1 : index
    %c0_69 = arith.constant 0 : index
    %c0_70 = arith.constant 0 : index
    %101 = vector.load %arg6[%c1_68, %c0_69, %c0_70] : memref<3x4x12xbf16, #tpu.memory_space<vmem>>, vector<1x4x12xbf16>
    %102 = vector.shape_cast %101 : vector<1x4x12xbf16> to vector<4x12xbf16>
    %cst_71 = arith.constant dense<0.000000e+00> : vector<4x512xf32>
    %103 = tpu.matmul %102, %100, %cst_71 {dimension_numbers = #tpu.dot_dimension_numbers<[1], [0], [0], [1], [0, 0, 1, 1], [], []>} : vector<4x12xbf16>, vector<12x512xbf16>, vector<4x512xf32> -> vector<4x512xf32>
    %104 = arith.addf %92, %103 : vector<4x512xf32>
    %c0_72 = arith.constant 0 : index
    %c143_73 = arith.constant 143 : index
    %105 = vector.load %arg11[%c0_72, %c143_73] : memref<4x768xbf16, #tpu.memory_space<vmem>>, vector<4x512xbf16>
    %106 = vector.broadcast %1 : vector<1x512xbf16> to vector<4x512xbf16>
    %107 = arith.mulf %105, %106 : vector<4x512xbf16>
    %c0_74 = arith.constant 0 : index
    %c144_75 = arith.constant 144 : index
    %108 = vector.load %arg11[%c0_74, %c144_75] : memref<4x768xbf16, #tpu.memory_space<vmem>>, vector<4x512xbf16>
    %c0_76 = arith.constant 0 : index
    %c145_77 = arith.constant 145 : index
    %109 = vector.load %arg11[%c0_76, %c145_77] : memref<4x768xbf16, #tpu.memory_space<vmem>>, vector<4x512xbf16>
    %110 = vector.broadcast %3 : vector<1x512xbf16> to vector<4x512xbf16>
    %111 = arith.mulf %109, %110 : vector<4x512xbf16>
    %112 = tpu.concatenate %107, %108, %111 in 0 : vector<4x512xbf16>, vector<4x512xbf16>, vector<4x512xbf16> -> vector<12x512xbf16>
    %c2_78 = arith.constant 2 : index
    %c0_79 = arith.constant 0 : index
    %c0_80 = arith.constant 0 : index
    %113 = vector.load %arg6[%c2_78, %c0_79, %c0_80] : memref<3x4x12xbf16, #tpu.memory_space<vmem>>, vector<1x4x12xbf16>
    %114 = vector.shape_cast %113 : vector<1x4x12xbf16> to vector<4x12xbf16>
    %cst_81 = arith.constant dense<0.000000e+00> : vector<4x512xf32>
    %115 = tpu.matmul %114, %112, %cst_81 {dimension_numbers = #tpu.dot_dimension_numbers<[1], [0], [0], [1], [0, 0, 1, 1], [], []>} : vector<4x12xbf16>, vector<12x512xbf16>, vector<4x512xf32> -> vector<4x512xf32>
    %116 = vector.broadcast %5 : vector<1x512xf32> to vector<4x512xf32>
    %117 = arith.mulf %115, %116 : vector<4x512xf32>
    %118 = arith.addf %104, %117 : vector<4x512xf32>
    %cst_82 = arith.constant dense<0.000000e+00> : vector<4xf32>
    %119 = vector.multi_reduction <add>, %118, %cst_82 [1] : vector<4x512xf32> to vector<4xf32>
    %120 = vector.shape_cast %119 : vector<4xf32> to vector<4x1xf32>
    %cst_83 = arith.constant 0.001953125 : f32
    %121 = vector.broadcast %cst_83 : f32 to vector<4x1xf32>
    %122 = arith.mulf %120, %121 : vector<4x1xf32>
    %123 = vector.broadcast %122 : vector<4x1xf32> to vector<4x512xf32>
    %124 = arith.subf %118, %123 : vector<4x512xf32>
    %125 = arith.mulf %124, %124 : vector<4x512xf32>
    %cst_84 = arith.constant dense<0.000000e+00> : vector<4xf32>
    %126 = vector.multi_reduction <add>, %125, %cst_84 [1] : vector<4x512xf32> to vector<4xf32>
    %127 = vector.shape_cast %126 : vector<4xf32> to vector<4x1xf32>
    %cst_85 = arith.constant 0.001953125 : f32
    %128 = vector.broadcast %cst_85 : f32 to vector<4x1xf32>
    %129 = arith.mulf %127, %128 : vector<4x1xf32>
    %c0_86 = arith.constant 0 : index
    %c0_87 = arith.constant 0 : index
    %130 = vector.load %arg7[%c0_86, %c0_87] : memref<4x1xf32, #tpu.memory_space<vmem>>, vector<4x1xf32>
    %cst_88 = arith.constant 9.99999974E-6 : f32
    %131 = vector.broadcast %cst_88 : f32 to vector<4x1xf32>
    %132 = arith.addf %129, %131 : vector<4x1xf32>
    %133 = math.rsqrt %132 : vector<4x1xf32>
    %134 = arith.mulf %130, %133 : vector<4x1xf32>
    %135 = vector.broadcast %134 : vector<4x1xf32> to vector<4x512xf32>
    %136 = arith.mulf %124, %135 : vector<4x512xf32>
    %c0_89 = arith.constant 0 : index
    %c0_90 = arith.constant 0 : index
    %137 = vector.load %arg8[%c0_89, %c0_90] : memref<4x1xf32, #tpu.memory_space<vmem>>, vector<4x1xf32>
    %138 = vector.broadcast %137 : vector<4x1xf32> to vector<4x512xf32>
    %139 = arith.addf %136, %138 : vector<4x512xf32>
    %cst_91 = arith.constant 0.000000e+00 : f32
    %140 = vector.broadcast %cst_91 : f32 to vector<4x512xf32>
    %141 = arith.maximumf %139, %140 : vector<4x512xf32>
    %c0_92 = arith.constant 0 : index
    %c0_93 = arith.constant 0 : index
    %142 = vector.load %arg9[%c0_92, %c0_93] : memref<4x512xf32, #tpu.memory_space<vmem>>, vector<4x512xf32>
    tpu.vector_store %arg9[%c0_92, %c0_93], %141 {strides = array<i32>} : memref<4x512xf32, #tpu.memory_space<vmem>>, vector<4x512xf32>,
    return
  }
}

</mosaic_0001>

<llo_original>
// kernel: _lambda_.1
$region0: #{_lambda_.1}
  #allocation0 [shape = 'u32[]', space=smem, size = 0x4, offset = 0x4, fixed_abs, tag = 'smem constant byte address 0x4 - core index']
  #allocation1 [shape = 'u32[72,128]{1,0:T(1,128)}', space=vmem, size = 0x9000, scoped, tag = 'internal scratch']
  #allocation2 [shape = 'bf16[8,768]{1,0:T(8,128)(2,1)}', space=vmem, size = 0x3000, scoped, tag = 'scratch operand']
  #allocation3 [shape = 'bf16[4,768]{1,0:T(4,128)(2,1)}', space=vmem, size = 0x1800, scoped, tag = 'scratch operand']
  %s0 = inlined_call_operand.vmem [shape: bf16[4,512], index: 0, kind: input, shape index: {}]
  %s1 = inlined_call_operand.vmem [shape: bf16[4,512], index: 1, kind: input, shape index: {}]
  %s2 = inlined_call_operand.vmem [shape: f32[4,512], index: 2, kind: input, shape index: {}]
  %s3 = inlined_call_operand.vmem [shape: bf16[3,4,24], index: 3, kind: input, shape index: {}]
  %s4 = inlined_call_operand.vmem [shape: f32[4,1], index: 4, kind: input, shape index: {}]
  %s5 = inlined_call_operand.vmem [shape: f32[4,1], index: 5, kind: input, shape index: {}]
  %s6 = inlined_call_operand.vmem [shape: bf16[3,4,12], index: 6, kind: input, shape index: {}]
  %s7 = inlined_call_operand.vmem [shape: f32[4,1], index: 7, kind: input, shape index: {}]
  %s8 = inlined_call_operand.vmem [shape: f32[4,1], index: 8, kind: input, shape index: {}]
  %s9 = inlined_call_operand.vmem [shape: f32[4,512], index: 9, kind: output, shape index: {}]
  %s10 = sld [smem:[#allocation0]]
  $region46: #{_lambda_.1} parent=0
    _
  %s12 = ssub.s32 1, %s10
  %s13 = scalar_select 0, %s12, %s10
  // Predicated region
  $region2: #{_lambda_.1} parent=0 // pred_check
    _
  $region3: #{_lambda_.1} parent=0 // pred_check_branch
    %15 = sbr.rel (0) target = $region5
  $region4: #{_lambda_.1} parent=0 // pred_region
    _
  $region5: #{_lambda_.1} parent=0 // pred_fallthru
    _
  // Predicated region
  $region6: #{_lambda_.1} parent=0 // pred_check
    _
  $region7: #{_lambda_.1} parent=0 // pred_check_branch
    %17 = sbr.rel (0) target = $region9
  $region8: #{_lambda_.1} parent=0 // pred_region
    _
  $region9: #{_lambda_.1} parent=0 // pred_fallthru
    _
  // Predicated region
  $region10: #{_lambda_.1} parent=0 // pred_check
    _
  $region11: #{_lambda_.1} parent=0 // pred_check_branch
    %19 = sbr.rel (0) target = $region13
  $region12: #{_lambda_.1} parent=0 // pred_region
    _
  $region13: #{_lambda_.1} parent=0 // pred_fallthru
    _
  // Predicated region
  $region14: #{_lambda_.1} parent=0 // pred_check
    _
  $region15: #{_lambda_.1} parent=0 // pred_check_branch
    %21 = sbr.rel (0) target = $region17
  $region16: #{_lambda_.1} parent=0 // pred_region
    _
  $region17: #{_lambda_.1} parent=0 // pred_fallthru
    _
  // Predicated region
  $region18: #{_lambda_.1} parent=0 // pred_check
    _
  $region19: #{_lambda_.1} parent=0 // pred_check_branch
    %23 = sbr.rel (0) target = $region21
  $region20: #{_lambda_.1} parent=0 // pred_region
    _
  $region21: #{_lambda_.1} parent=0 // pred_fallthru
    _
  // Predicated region
  $region22: #{_lambda_.1} parent=0 // pred_check
    _
  $region23: #{_lambda_.1} parent=0 // pred_check_branch
    %25 = sbr.rel (0) target = $region25
  $region24: #{_lambda_.1} parent=0 // pred_region
    _
  $region25: #{_lambda_.1} parent=0 // pred_fallthru
    _
  // Predicated region
  $region26: #{_lambda_.1} parent=0 // pred_check
    _
  $region27: #{_lambda_.1} parent=0 // pred_check_branch
    %27 = sbr.rel (0) target = $region29
  $region28: #{_lambda_.1} parent=0 // pred_region
    _
  $region29: #{_lambda_.1} parent=0 // pred_fallthru
    _
  // Predicated region
  $region30: #{_lambda_.1} parent=0 // pred_check
    _
  $region31: #{_lambda_.1} parent=0 // pred_check_branch
    %29 = sbr.rel (0) target = $region33
  $region32: #{_lambda_.1} parent=0 // pred_region
    _
  $region33: #{_lambda_.1} parent=0 // pred_fallthru
    _
  // Predicated region
  $region34: #{_lambda_.1} parent=0 // pred_check
    _
  $region35: #{_lambda_.1} parent=0 // pred_check_branch
    %31 = sbr.rel (0) target = $region37
  $region36: #{_lambda_.1} parent=0 // pred_region
    _
  $region37: #{_lambda_.1} parent=0 // pred_fallthru
    _
  %v33 = vld [vmem:[%s2] ss:$4 sm:$0xf]
  %v35 = vperm.slane %v33, 0
  %v36 = vperm.slane %v33, 1
  %v37 = vperm.slane %v33, 2
  %v38 = vperm.slane %v33, 3
  %v43 = vpack.c.bf16 %v36, %v35
  %v44 = vpack.c.bf16 %v38, %v37
  %s45 = scalar_lea.vmem %s2, 1
  %v46 = vld [vmem:[%s45] ss:$4 sm:$0xf]
  %v48 = vperm.slane %v46, 0
  %v49 = vperm.slane %v46, 1
  %v50 = vperm.slane %v46, 2
  %v51 = vperm.slane %v46, 3
  %v56 = vpack.c.bf16 %v49, %v48
  %v57 = vpack.c.bf16 %v51, %v50
  %s58 = scalar_lea.vmem %s2, 2
  %v59 = vld [vmem:[%s58] ss:$4 sm:$0xf]
  %s60 = scalar_lea.vmem %s2, 3
  %v61 = vld [vmem:[%s60] ss:$4 sm:$0xf]
  %62 = vst [vmem:[#allocation2] sm:$0xf] 0
  %63 = vst [vmem:[#allocation2 + $0x14] sm:$0xf] 0
  %v64 = vld [vmem:[%s0] sm:$0xff]
  %66 = vst [vmem:[#allocation1] ss:$2 sm:$0xff] %v64
  %v67 = vld.sshfl [vmem:[#allocation1] sm:$0xff pattern:$0x75643120]
  %v68 = vld.sshfl [vmem:[#allocation1 + $0x8] sm:$0xff pattern:$0x75643120]
  %71 = vst [vmem:[#allocation2 + $0x4] sm:$0x33] %v67
  %72 = vst [vmem:[#allocation2 + $0xc] sm:$0x33] %v68
  %v73 = vld [vmem:[%s1] sm:$0xff]
  %s75 = scalar_lea.vmem [#allocation1], 1
  %76 = vst [vmem:[%s75] ss:$2 sm:$0xff] %v73
  %v77 = vld.sshfl [vmem:[#allocation1] sm:$0xff pattern:$0x75643120]
  %v78 = vld.sshfl [vmem:[#allocation1 + $0x8] sm:$0xff pattern:$0x75643120]
  %81 = vst [vmem:[#allocation2 + $0x4] sm:$0xcc] %v77
  %82 = vst [vmem:[#allocation2 + $0xc] sm:$0xcc] %v78
  %v83 = vld [vmem:[#allocation2] sm:$0xff]
  %v84 = vld [vmem:[#allocation2 + $0x8] sm:$0xff]
  %v85 = vld [vmem:[#allocation2 + $0x10] sm:$0xf]
  %v88 = vunpack.c.l.b16 %v43
  %v89 = vunpack.c.h.b16 %v43
  %v90 = vunpack.c.l.b16 %v44
  %v91 = vunpack.c.h.b16 %v44
  %v92 = vpack.c.b16 %v88, %v88
  %v93 = vpack.c.b16 %v89, %v89
  %v94 = vpack.c.b16 %v90, %v90
  %v95 = vpack.c.b16 %v91, %v91
  %v97 = vpack.i.b16 %v92, %v92
  %v99 = vperm.slane %v97, 0
  %v101 = vpack.i.b16 %v93, %v93
  %v103 = vperm.slane %v101, 0
  %v105 = vpack.i.b16 %v94, %v94
  %v107 = vperm.slane %v105, 0
  %v109 = vpack.i.b16 %v95, %v95
  %v111 = vperm.slane %v109, 0
  %v112 = vunpack.c.l.bf16 %v83
  %v113 = vunpack.c.h.bf16 %v83
  %v114 = vunpack.c.l.bf16 %v84
  %v115 = vunpack.c.h.bf16 %v84
  %v116 = vunpack.c.l.bf16 %v85
  %v117 = vunpack.c.l.bf16 %v99
  %v118 = vunpack.c.l.bf16 %v103
  %v119 = vunpack.c.l.bf16 %v107
  %v120 = vunpack.c.l.bf16 %v111
  %125 = vrot.lane.b32.xlu0 %v117, 111
  %v126 = vpop.permute.xlu0 %125
  %127 = vrot.lane.b32.xlu0 %v118, 111
  %v128 = vpop.permute.xlu0 %127
  %129 = vrot.lane.b32.xlu0 %v119, 111
  %v130 = vpop.permute.xlu0 %129
  %131 = vrot.lane.b32.xlu0 %v120, 111
  %v132 = vpop.permute.xlu0 %131
  %vm133 = vcmask 908288
  %v134 = vsel %vm133, %v126, %v128
  %v135 = vsel %vm133, %v128, %v130
  %v136 = vsel %vm133, %v130, %v132
  %v142 = vmul.f32 %v112, %v126
  %v143 = vmul.f32 %v113, %v134
  %v144 = vmul.f32 %v114, %v135
  %v145 = vmul.f32 %v115, %v136
  %v146 = vmul.f32 %v116, %v132
  %v147 = vpack.c.bf16 %v143, %v142
  %v148 = vpack.c.bf16 %v145, %v144
  %v149 = vpack.c.bf16 %v146, %v146
  %v152 = vunpack.c.l.b16 %v56
  %v153 = vunpack.c.h.b16 %v56
  %v154 = vunpack.c.l.b16 %v57
  %v155 = vunpack.c.h.b16 %v57
  %v156 = vpack.c.b16 %v152, %v152
  %v157 = vpack.c.b16 %v153, %v153
  %v158 = vpack.c.b16 %v154, %v154
  %v159 = vpack.c.b16 %v155, %v155
  %v161 = vpack.i.b16 %v156, %v156
  %v163 = vperm.slane %v161, 0
  %v165 = vpack.i.b16 %v157, %v157
  %v167 = vperm.slane %v165, 0
  %v169 = vpack.i.b16 %v158, %v158
  %v171 = vperm.slane %v169, 0
  %v173 = vpack.i.b16 %v159, %v159
  %v175 = vperm.slane %v173, 0
  %v176 = vunpack.c.l.bf16 %v163
  %v177 = vunpack.c.l.bf16 %v167
  %v178 = vunpack.c.l.bf16 %v171
  %v179 = vunpack.c.l.bf16 %v175
  %184 = vrot.lane.b32.xlu0 %v176, 113
  %v185 = vpop.permute.xlu0 %184
  %186 = vrot.lane.b32.xlu0 %v177, 113
  %v187 = vpop.permute.xlu0 %186
  %188 = vrot.lane.b32.xlu0 %v178, 113
  %v189 = vpop.permute.xlu0 %188
  %190 = vrot.lane.b32.xlu0 %v179, 113
  %v191 = vpop.permute.xlu0 %190
  %vm192 = vcmask 924672
  %v193 = vsel %vm192, %v185, %v187
  %v194 = vsel %vm192, %v187, %v189
  %v195 = vsel %vm192, %v189, %v191
  %v201 = vmul.f32 %v112, %v185
  %v202 = vmul.f32 %v113, %v193
  %v203 = vmul.f32 %v114, %v194
  %v204 = vmul.f32 %v115, %v195
  %v205 = vmul.f32 %v116, %v191
  %v206 = vpack.c.bf16 %v202, %v201
  %v207 = vpack.c.bf16 %v204, %v203
  %v208 = vpack.c.bf16 %v205, %v205
  %v212 = vunpack.c.l.b16 %v147
  %v213 = vunpack.c.h.b16 %v147
  %v214 = vunpack.c.l.b16 %v148
  %v215 = vunpack.c.h.b16 %v148
  %v216 = vunpack.c.l.b16 %v149
  %v217 = vpack.c.b16 %v212, %v212
  %v218 = vpack.c.b16 %v213, %v213
  %v219 = vpack.c.b16 %v214, %v214
  %v220 = vpack.c.b16 %v215, %v215
  %v221 = vpack.c.b16 %v216, %v216
  %v225 = vunpack.c.l.b16 %v83
  %v226 = vunpack.c.h.b16 %v83
  %v227 = vunpack.c.l.b16 %v84
  %v228 = vunpack.c.h.b16 %v84
  %v229 = vunpack.c.l.b16 %v85
  %v230 = vpack.c.b16 %v225, %v225
  %v231 = vpack.c.b16 %v226, %v226
  %v232 = vpack.c.b16 %v227, %v227
  %v233 = vpack.c.b16 %v228, %v228
  %v234 = vpack.c.b16 %v229, %v229
  %235 = vrot.lane.b32.xlu0 %v230, 127
  %v236 = vpop.permute.xlu0 %235
  %237 = vrot.lane.b32.xlu0 %v231, 127
  %v238 = vpop.permute.xlu0 %237
  %239 = vrot.lane.b32.xlu0 %v232, 127
  %v240 = vpop.permute.xlu0 %239
  %241 = vrot.lane.b32.xlu0 %v233, 127
  %v242 = vpop.permute.xlu0 %241
  %243 = vrot.lane.b32.xlu0 %v234, 127
  %v244 = vpop.permute.xlu0 %243
  %vm245 = vcmask 1039360
  %v246 = vsel %vm245, %v236, %v238
  %v247 = vsel %vm245, %v238, %v240
  %v248 = vsel %vm245, %v240, %v242
  %v249 = vsel %vm245, %v242, %v244
  %v253 = vunpack.c.l.b16 %v206
  %v254 = vunpack.c.h.b16 %v206
  %v255 = vunpack.c.l.b16 %v207
  %v256 = vunpack.c.h.b16 %v207
  %v257 = vunpack.c.l.b16 %v208
  %v258 = vpack.c.b16 %v253, %v253
  %v259 = vpack.c.b16 %v254, %v254
  %v260 = vpack.c.b16 %v255, %v255
  %v261 = vpack.c.b16 %v256, %v256
  %v262 = vpack.c.b16 %v257, %v257
  %263 = vrot.lane.b32.xlu0 %v258, 126
  %v264 = vpop.permute.xlu0 %263
  %265 = vrot.lane.b32.xlu0 %v259, 126
  %v266 = vpop.permute.xlu0 %265
  %267 = vrot.lane.b32.xlu0 %v260, 126
  %v268 = vpop.permute.xlu0 %267
  %269 = vrot.lane.b32.xlu0 %v261, 126
  %v270 = vpop.permute.xlu0 %269
  %271 = vrot.lane.b32.xlu0 %v262, 126
  %v272 = vpop.permute.xlu0 %271
  %vm273 = vcmask 1031168
  %v274 = vsel %vm273, %v264, %v266
  %v275 = vsel %vm273, %v266, %v268
  %v276 = vsel %vm273, %v268, %v270
  %v277 = vsel %vm273, %v270, %v272
  %vm278 = vcmask 1043456
  %v281 = vsel %vm278, %v217, %v246
  %v284 = vsel %vm278, %v218, %v247
  %v287 = vsel %vm278, %v219, %v248
  %v290 = vsel %vm278, %v220, %v249
  %v293 = vsel %vm278, %v221, %v244
  %v294 = vld [vmem:[%s3] sm:$0x3]
  %300 = vrot.lane.b32.xlu0 %v281, 17
  %v301 = vpop.permute.xlu0 %300
  %302 = vrot.lane.b32.xlu0 %v284, 17
  %v303 = vpop.permute.xlu0 %302
  %304 = vrot.lane.b32.xlu0 %v287, 17
  %v305 = vpop.permute.xlu0 %304
  %306 = vrot.lane.b32.xlu0 %v290, 17
  %v307 = vpop.permute.xlu0 %306
  %308 = vrot.lane.b32.xlu0 %v293, 17
  %v309 = vpop.permute.xlu0 %308
  %310 = vrot.lane.b32.xlu0 %v274, 17
  %v311 = vpop.permute.xlu0 %310
  %312 = vrot.lane.b32.xlu0 %v275, 17
  %v313 = vpop.permute.xlu0 %312
  %314 = vrot.lane.b32.xlu0 %v276, 17
  %v315 = vpop.permute.xlu0 %314
  %316 = vrot.lane.b32.xlu0 %v277, 17
  %v317 = vpop.permute.xlu0 %316
  %318 = vrot.lane.b32.xlu0 %v272, 17
  %v319 = vpop.permute.xlu0 %318
  %vm320 = vcmask 138240
  %v321 = vsel %vm320, %v301, %v303
  %v322 = vsel %vm320, %v303, %v305
  %v323 = vsel %vm320, %v305, %v307
  %v324 = vsel %vm320, %v307, %v309
  %v325 = vsel %vm320, %v311, %v313
  %v326 = vsel %vm320, %v313, %v315
  %v327 = vsel %vm320, %v315, %v317
  %v328 = vsel %vm320, %v317, %v319
  %vm333 = vcmask 195584
  %v335 = vsel %vm333, %v294, 0
  %v338 = vsel %vm278, %v325, 0
  %v341 = vsel %vm278, %v326, 0
  %v344 = vsel %vm278, %v327, 0
  %v347 = vsel %vm278, %v328, 0
  %349 = vmatpush.bf16.msra.mxu0 0
  %350 = vmatpush.bf16.msra.mxu0 0
  %351 = vmatpush.bf16.msra.mxu0 0
  %352 = vmatpush.bf16.msra.mxu0 0
  %353 = vmatpush.bf16.msra.mxu0 0
  %354 = vmatpush.bf16.msra.mxu0 0
  %355 = vmatpush.bf16.msra.mxu0 %v338
  %356 = vmatpush.bf16.msra.mxu0 %v321
  %357 = vmatmul.bf16.gmra.mxu0 %v335
  %v358 = vpop.f32.mrf.mxu0
  %v359 = vadd.f32 0.0, %v358
  %v360 = vpop.f32.mrf.mxu0
  %361 = vdwg.mxu0
  %362 = vmatpush.bf16.msra.mxu0 0
  %363 = vmatpush.bf16.msra.mxu0 0
  %364 = vmatpush.bf16.msra.mxu0 0
  %365 = vmatpush.bf16.msra.mxu0 0
  %366 = vmatpush.bf16.msra.mxu0 0
  %367 = vmatpush.bf16.msra.mxu0 0
  %368 = vmatpush.bf16.msra.mxu0 %v341
  %369 = vmatpush.bf16.msra.mxu0 %v322
  %370 = vmatmul.bf16.gmra.mxu0 %v335
  %v371 = vpop.f32.mrf.mxu0
  %v372 = vadd.f32 0.0, %v371
  %v373 = vpop.f32.mrf.mxu0
  %374 = vdwg.mxu0
  %375 = vmatpush.bf16.msra.mxu0 0
  %376 = vmatpush.bf16.msra.mxu0 0
  %377 = vmatpush.bf16.msra.mxu0 0
  %378 = vmatpush.bf16.msra.mxu0 0
  %379 = vmatpush.bf16.msra.mxu0 0
  %380 = vmatpush.bf16.msra.mxu0 0
  %381 = vmatpush.bf16.msra.mxu0 %v344
  %382 = vmatpush.bf16.msra.mxu0 %v323
  %383 = vmatmul.bf16.gmra.mxu0 %v335
  %v384 = vpop.f32.mrf.mxu0
  %v385 = vadd.f32 0.0, %v384
  %v386 = vpop.f32.mrf.mxu0
  %387 = vdwg.mxu0
  %388 = vmatpush.bf16.msra.mxu0 0
  %389 = vmatpush.bf16.msra.mxu0 0
  %390 = vmatpush.bf16.msra.mxu0 0
  %391 = vmatpush.bf16.msra.mxu0 0
  %392 = vmatpush.bf16.msra.mxu0 0
  %393 = vmatpush.bf16.msra.mxu0 0
  %394 = vmatpush.bf16.msra.mxu0 %v347
  %395 = vmatpush.bf16.msra.mxu0 %v324
  %396 = vmatmul.bf16.gmra.mxu0 %v335
  %v397 = vpop.f32.mrf.mxu0
  %v398 = vadd.f32 0.0, %v397
  %v399 = vpop.f32.mrf.mxu0
  %400 = vdwg.mxu0
  %v402 = vperm.slane %v59, 0
  %v403 = vperm.slane %v59, 1
  %v404 = vperm.slane %v59, 2
  %v405 = vperm.slane %v59, 3
  %v410 = vmul.f32 %v359, %v402
  %v411 = vmul.f32 %v372, %v403
  %v412 = vmul.f32 %v385, %v404
  %v413 = vmul.f32 %v398, %v405
  %414 = vrot.lane.b32.xlu0 %v117, 127
  %v415 = vpop.permute.xlu0 %414
  %416 = vrot.lane.b32.xlu0 %v118, 127
  %v417 = vpop.permute.xlu0 %416
  %418 = vrot.lane.b32.xlu0 %v119, 127
  %v419 = vpop.permute.xlu0 %418
  %420 = vrot.lane.b32.xlu0 %v120, 127
  %v421 = vpop.permute.xlu0 %420
  %vm422 = vcmask 1039360
  %v423 = vsel %vm422, %v415, %v417
  %v424 = vsel %vm422, %v417, %v419
  %v425 = vsel %vm422, %v419, %v421
  %v431 = vmul.f32 %v112, %v415
  %v432 = vmul.f32 %v113, %v423
  %v433 = vmul.f32 %v114, %v424
  %v434 = vmul.f32 %v115, %v425
  %v435 = vmul.f32 %v116, %v421
  %v436 = vpack.c.bf16 %v432, %v431
  %v437 = vpack.c.bf16 %v434, %v433
  %v438 = vpack.c.bf16 %v435, %v435
  %v439 = vld [vmem:[#allocation2 + $0x4] sm:$0xff]
  %v440 = vld [vmem:[#allocation2 + $0xc] sm:$0xff]
  %v441 = vld [vmem:[#allocation2 + $0x4] sm:$0xff]
  %v442 = vld [vmem:[#allocation2 + $0xc] sm:$0xff]
  %v443 = vld [vmem:[#allocation2 + $0x14] sm:$0xf]
  %v444 = vunpack.c.l.bf16 %v441
  %v445 = vunpack.c.h.bf16 %v441
  %v446 = vunpack.c.l.bf16 %v442
  %v447 = vunpack.c.h.bf16 %v442
  %v448 = vunpack.c.l.bf16 %v443
  %449 = vrot.lane.b32.xlu0 %v176, 1
  %v450 = vpop.permute.xlu0 %449
  %451 = vrot.lane.b32.xlu0 %v177, 1
  %v452 = vpop.permute.xlu0 %451
  %453 = vrot.lane.b32.xlu0 %v178, 1
  %v454 = vpop.permute.xlu0 %453
  %455 = vrot.lane.b32.xlu0 %v179, 1
  %v456 = vpop.permute.xlu0 %455
  %vm457 = vcmask 7168
  %v458 = vsel %vm457, %v450, %v452
  %v459 = vsel %vm457, %v452, %v454
  %v460 = vsel %vm457, %v454, %v456
  %v466 = vmul.f32 %v444, %v450
  %v467 = vmul.f32 %v445, %v458
  %v468 = vmul.f32 %v446, %v459
  %v469 = vmul.f32 %v447, %v460
  %v470 = vmul.f32 %v448, %v456
  %v471 = vpack.c.bf16 %v467, %v466
  %v472 = vpack.c.bf16 %v469, %v468
  %v473 = vpack.c.bf16 %v470, %v470
  %v477 = vunpack.c.l.b16 %v436
  %v478 = vunpack.c.h.b16 %v436
  %v479 = vunpack.c.l.b16 %v437
  %v480 = vunpack.c.h.b16 %v437
  %v481 = vunpack.c.l.b16 %v438
  %v482 = vpack.c.b16 %v477, %v477
  %v483 = vpack.c.b16 %v478, %v478
  %v484 = vpack.c.b16 %v479, %v479
  %v485 = vpack.c.b16 %v480, %v480
  %v486 = vpack.c.b16 %v481, %v481
  %v489 = vunpack.c.l.b16 %v439
  %v490 = vunpack.c.h.b16 %v439
  %v491 = vunpack.c.l.b16 %v440
  %v492 = vunpack.c.h.b16 %v440
  %v493 = vpack.c.b16 %v489, %v489
  %v494 = vpack.c.b16 %v490, %v490
  %v495 = vpack.c.b16 %v491, %v491
  %v496 = vpack.c.b16 %v492, %v492
  %497 = vrot.lane.b32.xlu0 %v493, 127
  %v498 = vpop.permute.xlu0 %497
  %499 = vrot.lane.b32.xlu0 %v494, 127
  %v500 = vpop.permute.xlu0 %499
  %501 = vrot.lane.b32.xlu0 %v495, 127
  %v502 = vpop.permute.xlu0 %501
  %503 = vrot.lane.b32.xlu0 %v496, 127
  %v504 = vpop.permute.xlu0 %503
  %v505 = vsel %vm245, %v498, %v500
  %v506 = vsel %vm245, %v500, %v502
  %v507 = vsel %vm245, %v502, %v504
  %v511 = vunpack.c.l.b16 %v471
  %v512 = vunpack.c.h.b16 %v471
  %v513 = vunpack.c.l.b16 %v472
  %v514 = vunpack.c.h.b16 %v472
  %v515 = vunpack.c.l.b16 %v473
  %v516 = vpack.c.b16 %v511, %v511
  %v517 = vpack.c.b16 %v512, %v512
  %v518 = vpack.c.b16 %v513, %v513
  %v519 = vpack.c.b16 %v514, %v514
  %v520 = vpack.c.b16 %v515, %v515
  %521 = vrot.lane.b32.xlu0 %v516, 126
  %v522 = vpop.permute.xlu0 %521
  %523 = vrot.lane.b32.xlu0 %v517, 126
  %v524 = vpop.permute.xlu0 %523
  %525 = vrot.lane.b32.xlu0 %v518, 126
  %v526 = vpop.permute.xlu0 %525
  %527 = vrot.lane.b32.xlu0 %v519, 126
  %v528 = vpop.permute.xlu0 %527
  %529 = vrot.lane.b32.xlu0 %v520, 126
  %v530 = vpop.permute.xlu0 %529
  %v531 = vsel %vm273, %v522, %v524
  %v532 = vsel %vm273, %v524, %v526
  %v533 = vsel %vm273, %v526, %v528
  %v534 = vsel %vm273, %v528, %v530
  %v537 = vsel %vm278, %v482, %v498
  %v540 = vsel %vm278, %v483, %v505
  %v543 = vsel %vm278, %v484, %v506
  %v546 = vsel %vm278, %v485, %v507
  %v549 = vsel %vm278, %v486, %v504
  %s550 = scalar_lea.vmem %s3, 2
  %v551 = vld [vmem:[%s550] sm:$0x3]
  %557 = vrot.lane.b32.xlu0 %v537, 1
  %v558 = vpop.permute.xlu0 %557
  %559 = vrot.lane.b32.xlu0 %v540, 1
  %v560 = vpop.permute.xlu0 %559
  %561 = vrot.lane.b32.xlu0 %v543, 1
  %v562 = vpop.permute.xlu0 %561
  %563 = vrot.lane.b32.xlu0 %v546, 1
  %v564 = vpop.permute.xlu0 %563
  %565 = vrot.lane.b32.xlu0 %v549, 1
  %v566 = vpop.permute.xlu0 %565
  %567 = vrot.lane.b32.xlu0 %v522, 1
  %v568 = vpop.permute.xlu0 %567
  %569 = vrot.lane.b32.xlu0 %v531, 1
  %v570 = vpop.permute.xlu0 %569
  %571 = vrot.lane.b32.xlu0 %v532, 1
  %v572 = vpop.permute.xlu0 %571
  %573 = vrot.lane.b32.xlu0 %v533, 1
  %v574 = vpop.permute.xlu0 %573
  %575 = vrot.lane.b32.xlu0 %v534, 1
  %v576 = vpop.permute.xlu0 %575
  %vm577 = vcmask 7168
  %v578 = vsel %vm577, %v558, %v560
  %v579 = vsel %vm577, %v560, %v562
  %v580 = vsel %vm577, %v562, %v564
  %v581 = vsel %vm577, %v564, %v566
  %v582 = vsel %vm577, %v568, %v570
  %v583 = vsel %vm577, %v570, %v572
  %v584 = vsel %vm577, %v572, %v574
  %v585 = vsel %vm577, %v574, %v576
  %v591 = vsel %vm333, %v551, 0
  %v594 = vsel %vm278, %v582, 0
  %v597 = vsel %vm278, %v583, 0
  %v600 = vsel %vm278, %v584, 0
  %v603 = vsel %vm278, %v585, 0
  %605 = vmatpush.bf16.msra.mxu0 0
  %606 = vmatpush.bf16.msra.mxu0 0
  %607 = vmatpush.bf16.msra.mxu0 0
  %608 = vmatpush.bf16.msra.mxu0 0
  %609 = vmatpush.bf16.msra.mxu0 0
  %610 = vmatpush.bf16.msra.mxu0 0
  %611 = vmatpush.bf16.msra.mxu0 %v594
  %612 = vmatpush.bf16.msra.mxu0 %v578
  %613 = vmatmul.bf16.gmra.mxu0 %v591
  %v614 = vpop.f32.mrf.mxu0
  %v615 = vadd.f32 0.0, %v614
  %v616 = vpop.f32.mrf.mxu0
  %617 = vdwg.mxu0
  %618 = vmatpush.bf16.msra.mxu0 0
  %619 = vmatpush.bf16.msra.mxu0 0
  %620 = vmatpush.bf16.msra.mxu0 0
  %621 = vmatpush.bf16.msra.mxu0 0
  %622 = vmatpush.bf16.msra.mxu0 0
  %623 = vmatpush.bf16.msra.mxu0 0
  %624 = vmatpush.bf16.msra.mxu0 %v597
  %625 = vmatpush.bf16.msra.mxu0 %v579
  %626 = vmatmul.bf16.gmra.mxu0 %v591
  %v627 = vpop.f32.mrf.mxu0
  %v628 = vadd.f32 0.0, %v627
  %v629 = vpop.f32.mrf.mxu0
  %630 = vdwg.mxu0
  %631 = vmatpush.bf16.msra.mxu0 0
  %632 = vmatpush.bf16.msra.mxu0 0
  %633 = vmatpush.bf16.msra.mxu0 0
  %634 = vmatpush.bf16.msra.mxu0 0
  %635 = vmatpush.bf16.msra.mxu0 0
  %636 = vmatpush.bf16.msra.mxu0 0
  %637 = vmatpush.bf16.msra.mxu0 %v600
  %638 = vmatpush.bf16.msra.mxu0 %v580
  %639 = vmatmul.bf16.gmra.mxu0 %v591
  %v640 = vpop.f32.mrf.mxu0
  %v641 = vadd.f32 0.0, %v640
  %v642 = vpop.f32.mrf.mxu0
  %643 = vdwg.mxu0
  %644 = vmatpush.bf16.msra.mxu0 0
  %645 = vmatpush.bf16.msra.mxu0 0
  %646 = vmatpush.bf16.msra.mxu0 0
  %647 = vmatpush.bf16.msra.mxu0 0
  %648 = vmatpush.bf16.msra.mxu0 0
  %649 = vmatpush.bf16.msra.mxu0 0
  %650 = vmatpush.bf16.msra.mxu0 %v603
  %651 = vmatpush.bf16.msra.mxu0 %v581
  %652 = vmatmul.bf16.gmra.mxu0 %v591
  %v653 = vpop.f32.mrf.mxu0
  %v654 = vadd.f32 0.0, %v653
  %v655 = vpop.f32.mrf.mxu0
  %656 = vdwg.mxu0
  %v657 = vadd.f32 %v410, %v615
  %v658 = vadd.f32 %v411, %v628
  %v659 = vadd.f32 %v412, %v641
  %v660 = vadd.f32 %v413, %v654
  %661 = vrot.lane.b32.xlu0 %v117, 15
  %v662 = vpop.permute.xlu0 %661
  %663 = vrot.lane.b32.xlu0 %v118, 15
  %v664 = vpop.permute.xlu0 %663
  %665 = vrot.lane.b32.xlu0 %v119, 15
  %v666 = vpop.permute.xlu0 %665
  %667 = vrot.lane.b32.xlu0 %v120, 15
  %v668 = vpop.permute.xlu0 %667
  %vm669 = vcmask 121856
  %v670 = vsel %vm669, %v662, %v664
  %v671 = vsel %vm669, %v664, %v666
  %v672 = vsel %vm669, %v666, %v668
  %v678 = vmul.f32 %v444, %v662
  %v679 = vmul.f32 %v445, %v670
  %v680 = vmul.f32 %v446, %v671
  %v681 = vmul.f32 %v447, %v672
  %v682 = vmul.f32 %v448, %v668
  %v683 = vpack.c.bf16 %v679, %v678
  %v684 = vpack.c.bf16 %v681, %v680
  %v685 = vpack.c.bf16 %v682, %v682
  %686 = vrot.lane.b32.xlu0 %v176, 17
  %v687 = vpop.permute.xlu0 %686
  %688 = vrot.lane.b32.xlu0 %v177, 17
  %v689 = vpop.permute.xlu0 %688
  %690 = vrot.lane.b32.xlu0 %v178, 17
  %v691 = vpop.permute.xlu0 %690
  %692 = vrot.lane.b32.xlu0 %v179, 17
  %v693 = vpop.permute.xlu0 %692
  %vm694 = vcmask 138240
  %v695 = vsel %vm694, %v687, %v689
  %v696 = vsel %vm694, %v689, %v691
  %v697 = vsel %vm694, %v691, %v693
  %v703 = vmul.f32 %v444, %v687
  %v704 = vmul.f32 %v445, %v695
  %v705 = vmul.f32 %v446, %v696
  %v706 = vmul.f32 %v447, %v697
  %v707 = vmul.f32 %v448, %v693
  %v708 = vpack.c.bf16 %v704, %v703
  %v709 = vpack.c.bf16 %v706, %v705
  %v710 = vpack.c.bf16 %v707, %v707
  %v714 = vunpack.c.l.b16 %v683
  %v715 = vunpack.c.h.b16 %v683
  %v716 = vunpack.c.l.b16 %v684
  %v717 = vunpack.c.h.b16 %v684
  %v718 = vunpack.c.l.b16 %v685
  %v719 = vpack.c.b16 %v714, %v714
  %v720 = vpack.c.b16 %v715, %v715
  %v721 = vpack.c.b16 %v716, %v716
  %v722 = vpack.c.b16 %v717, %v717
  %v723 = vpack.c.b16 %v718, %v718
  %v727 = vunpack.c.l.b16 %v441
  %v728 = vunpack.c.h.b16 %v441
  %v729 = vunpack.c.l.b16 %v442
  %v730 = vunpack.c.h.b16 %v442
  %v731 = vunpack.c.l.b16 %v443
  %v732 = vpack.c.b16 %v727, %v727
  %v733 = vpack.c.b16 %v728, %v728
  %v734 = vpack.c.b16 %v729, %v729
  %v735 = vpack.c.b16 %v730, %v730
  %v736 = vpack.c.b16 %v731, %v731
  %737 = vrot.lane.b32.xlu0 %v732, 127
  %v738 = vpop.permute.xlu0 %737
  %739 = vrot.lane.b32.xlu0 %v733, 127
  %v740 = vpop.permute.xlu0 %739
  %741 = vrot.lane.b32.xlu0 %v734, 127
  %v742 = vpop.permute.xlu0 %741
  %743 = vrot.lane.b32.xlu0 %v735, 127
  %v744 = vpop.permute.xlu0 %743
  %745 = vrot.lane.b32.xlu0 %v736, 127
  %v746 = vpop.permute.xlu0 %745
  %v747 = vsel %vm245, %v738, %v740
  %v748 = vsel %vm245, %v740, %v742
  %v749 = vsel %vm245, %v742, %v744
  %v750 = vsel %vm245, %v744, %v746
  %v754 = vunpack.c.l.b16 %v708
  %v755 = vunpack.c.h.b16 %v708
  %v756 = vunpack.c.l.b16 %v709
  %v757 = vunpack.c.h.b16 %v709
  %v758 = vunpack.c.l.b16 %v710
  %v759 = vpack.c.b16 %v754, %v754
  %v760 = vpack.c.b16 %v755, %v755
  %v761 = vpack.c.b16 %v756, %v756
  %v762 = vpack.c.b16 %v757, %v757
  %v763 = vpack.c.b16 %v758, %v758
  %764 = vrot.lane.b32.xlu0 %v759, 126
  %v765 = vpop.permute.xlu0 %764
  %766 = vrot.lane.b32.xlu0 %v760, 126
  %v767 = vpop.permute.xlu0 %766
  %768 = vrot.lane.b32.xlu0 %v761, 126
  %v769 = vpop.permute.xlu0 %768
  %770 = vrot.lane.b32.xlu0 %v762, 126
  %v771 = vpop.permute.xlu0 %770
  %772 = vrot.lane.b32.xlu0 %v763, 126
  %v773 = vpop.permute.xlu0 %772
  %v774 = vsel %vm273, %v765, %v767
  %v775 = vsel %vm273, %v767, %v769
  %v776 = vsel %vm273, %v769, %v771
  %v777 = vsel %vm273, %v771, %v773
  %v780 = vsel %vm278, %v719, %v747
  %v783 = vsel %vm278, %v720, %v748
  %v786 = vsel %vm278, %v721, %v749
  %v789 = vsel %vm278, %v722, %v750
  %v792 = vsel %vm278, %v723, %v746
  %s793 = scalar_lea.vmem %s3, 4
  %v794 = vld [vmem:[%s793] sm:$0x3]
  %800 = vrot.lane.b32.xlu0 %v780, 113
  %v801 = vpop.permute.xlu0 %800
  %802 = vrot.lane.b32.xlu0 %v783, 113
  %v803 = vpop.permute.xlu0 %802
  %804 = vrot.lane.b32.xlu0 %v786, 113
  %v805 = vpop.permute.xlu0 %804
  %806 = vrot.lane.b32.xlu0 %v789, 113
  %v807 = vpop.permute.xlu0 %806
  %808 = vrot.lane.b32.xlu0 %v792, 113
  %v809 = vpop.permute.xlu0 %808
  %810 = vrot.lane.b32.xlu0 %v774, 113
  %v811 = vpop.permute.xlu0 %810
  %812 = vrot.lane.b32.xlu0 %v775, 113
  %v813 = vpop.permute.xlu0 %812
  %814 = vrot.lane.b32.xlu0 %v776, 113
  %v815 = vpop.permute.xlu0 %814
  %816 = vrot.lane.b32.xlu0 %v777, 113
  %v817 = vpop.permute.xlu0 %816
  %818 = vrot.lane.b32.xlu0 %v773, 113
  %v819 = vpop.permute.xlu0 %818
  %vm820 = vcmask 924672
  %v821 = vsel %vm820, %v801, %v803
  %v822 = vsel %vm820, %v803, %v805
  %v823 = vsel %vm820, %v805, %v807
  %v824 = vsel %vm820, %v807, %v809
  %v825 = vsel %vm820, %v811, %v813
  %v826 = vsel %vm820, %v813, %v815
  %v827 = vsel %vm820, %v815, %v817
  %v828 = vsel %vm820, %v817, %v819
  %v834 = vsel %vm333, %v794, 0
  %v837 = vsel %vm278, %v825, 0
  %v840 = vsel %vm278, %v826, 0
  %v843 = vsel %vm278, %v827, 0
  %v846 = vsel %vm278, %v828, 0
  %848 = vmatpush.bf16.msra.mxu0 0
  %849 = vmatpush.bf16.msra.mxu0 0
  %850 = vmatpush.bf16.msra.mxu0 0
  %851 = vmatpush.bf16.msra.mxu0 0
  %852 = vmatpush.bf16.msra.mxu0 0
  %853 = vmatpush.bf16.msra.mxu0 0
  %854 = vmatpush.bf16.msra.mxu0 %v837
  %855 = vmatpush.bf16.msra.mxu0 %v821
  %856 = vmatmul.bf16.gmra.mxu0 %v834
  %v857 = vpop.f32.mrf.mxu0
  %v858 = vadd.f32 0.0, %v857
  %v859 = vpop.f32.mrf.mxu0
  %860 = vdwg.mxu0
  %861 = vmatpush.bf16.msra.mxu0 0
  %862 = vmatpush.bf16.msra.mxu0 0
  %863 = vmatpush.bf16.msra.mxu0 0
  %864 = vmatpush.bf16.msra.mxu0 0
  %865 = vmatpush.bf16.msra.mxu0 0
  %866 = vmatpush.bf16.msra.mxu0 0
  %867 = vmatpush.bf16.msra.mxu0 %v840
  %868 = vmatpush.bf16.msra.mxu0 %v822
  %869 = vmatmul.bf16.gmra.mxu0 %v834
  %v870 = vpop.f32.mrf.mxu0
  %v871 = vadd.f32 0.0, %v870
  %v872 = vpop.f32.mrf.mxu0
  %873 = vdwg.mxu0
  %874 = vmatpush.bf16.msra.mxu0 0
  %875 = vmatpush.bf16.msra.mxu0 0
  %876 = vmatpush.bf16.msra.mxu0 0
  %877 = vmatpush.bf16.msra.mxu0 0
  %878 = vmatpush.bf16.msra.mxu0 0
  %879 = vmatpush.bf16.msra.mxu0 0
  %880 = vmatpush.bf16.msra.mxu0 %v843
  %881 = vmatpush.bf16.msra.mxu0 %v823
  %882 = vmatmul.bf16.gmra.mxu0 %v834
  %v883 = vpop.f32.mrf.mxu0
  %v884 = vadd.f32 0.0, %v883
  %v885 = vpop.f32.mrf.mxu0
  %886 = vdwg.mxu0
  %887 = vmatpush.bf16.msra.mxu0 0
  %888 = vmatpush.bf16.msra.mxu0 0
  %889 = vmatpush.bf16.msra.mxu0 0
  %890 = vmatpush.bf16.msra.mxu0 0
  %891 = vmatpush.bf16.msra.mxu0 0
  %892 = vmatpush.bf16.msra.mxu0 0
  %893 = vmatpush.bf16.msra.mxu0 %v846
  %894 = vmatpush.bf16.msra.mxu0 %v824
  %895 = vmatmul.bf16.gmra.mxu0 %v834
  %v896 = vpop.f32.mrf.mxu0
  %v897 = vadd.f32 0.0, %v896
  %v898 = vpop.f32.mrf.mxu0
  %899 = vdwg.mxu0
  %v901 = vperm.slane %v61, 0
  %v902 = vperm.slane %v61, 1
  %v903 = vperm.slane %v61, 2
  %v904 = vperm.slane %v61, 3
  %v909 = vmul.f32 %v858, %v901
  %v910 = vmul.f32 %v871, %v902
  %v911 = vmul.f32 %v884, %v903
  %v912 = vmul.f32 %v897, %v904
  %v913 = vadd.f32 %v657, %v909
  %v914 = vadd.f32 %v658, %v910
  %v915 = vadd.f32 %v659, %v911
  %v916 = vadd.f32 %v660, %v912
  %v917 = vsel %vm278, %v913, 0.0
  %v918 = vsel %vm278, %v914, 0.0
  %v919 = vadd.f32 %v917, %v918
  %v920 = vsel %vm278, %v915, 0.0
  %v921 = vadd.f32 %v919, %v920
  %v922 = vsel %vm278, %v916, 0.0
  %v923 = vadd.f32 %v921, %v922
  %924 = vadd.xlane.f32.xlu0 %v923
  %v925 = vpop.xlane.xlu0 %924
  %v926 = vmul.f32 %v925, 0.001953125
  %v927 = vsub.f32 %v913, %v926
  %v928 = vsub.f32 %v914, %v926
  %v929 = vsub.f32 %v915, %v926
  %v930 = vsub.f32 %v916, %v926
  %v931 = vmul.f32 %v927, %v927
  %v932 = vmul.f32 %v928, %v928
  %v933 = vmul.f32 %v929, %v929
  %v934 = vmul.f32 %v930, %v930
  %v935 = vsel %vm278, %v931, 0.0
  %v936 = vsel %vm278, %v932, 0.0
  %v937 = vadd.f32 %v935, %v936
  %v938 = vsel %vm278, %v933, 0.0
  %v939 = vadd.f32 %v937, %v938
  %v940 = vsel %vm278, %v934, 0.0
  %v941 = vadd.f32 %v939, %v940
  %942 = vadd.xlane.f32.xlu0 %v941
  %v943 = vpop.xlane.xlu0 %942
  %v944 = vmul.f32 %v943, 0.001953125
  %v945 = vld [vmem:[%s4] sm:$0xf]
  %v946 = vadd.f32 %v944, 1e-05
  %v947 = vrsqrt.pop %v946
  %v948 = vmul.f32 %v947, %v946
  %v949 = vmul.f32 %v948, %v947
  %v950 = vmul.f32 0.5, %v949
  %v951 = vsub.f32 1.5, %v950
  %v952 = vmul.f32 %v947, %v951
  %vm953 = vweird.f32 %v946
  %vm954 = vweird.f32 %v947
  %vm955 = vmor %vm953, %vm954
  %v956 = vsel %vm955, %v947, %v952
  %v957 = vmul.f32 %v945, %v956
  %959 = vset.pattern.permute.xlu0 0
  %960 = vperm.xlu0 %959, %v957
  %v961 = vpop.permute.xlu0 %960
  %v963 = vmul.f32 %v927, %v961
  %v964 = vmul.f32 %v928, %v961
  %v965 = vmul.f32 %v929, %v961
  %v966 = vmul.f32 %v930, %v961
  %v967 = vld [vmem:[%s5] sm:$0xf]
  %969 = vset.pattern.permute.xlu0 0
  %970 = vperm.xlu0 %969, %v967
  %v971 = vpop.permute.xlu0 %970
  %v973 = vadd.f32 %v963, %v971
  %v974 = vadd.f32 %v964, %v971
  %v975 = vadd.f32 %v965, %v971
  %v976 = vadd.f32 %v966, %v971
  %v977 = vmax.f32 %v973, 0.0
  %v978 = vmax.f32 %v974, 0.0
  %v979 = vmax.f32 %v975, 0.0
  %v980 = vmax.f32 %v976, 0.0
  %981 = vst [vmem:[#allocation3] sm:$0x3] 0
  %982 = vst [vmem:[#allocation3 + $0xa] sm:$0x3] 0
  %v983 = vpack.c.bf16 %v978, %v977
  %v984 = vpack.c.bf16 %v980, %v979
  %v987 = vrot.slane %v983, 2
  %v988 = vrot.slane %v984, 4
  %v989 = vrot.slane %v984, 6
  %vm990 = vcmask 1041408
  %v993 = vsel %vm990, %v983, %v987
  %vm994 = vcmask 1045508
  %v997 = vsel %vm994, %v988, %v989
  %v998 = vsel %vm278, %v993, %v997
  %1000 = vst [vmem:[#allocation3 + $0x2] sm:$0xff] %v998
  %v1001 = vld [vmem:[#allocation3] sm:$0xff]
  %v1002 = vld [vmem:[#allocation3 + $0x8] sm:$0x3]
  %v1003 = vunpack.c.l.bf16 %v1001
  %v1004 = vunpack.c.h.bf16 %v1001
  %v1005 = vunpack.c.l.bf16 %v1002
  %v1006 = vrot.slane %v118, 4
  %v1007 = vrot.slane %v120, 4
  %v1008 = vsel %vm278, %v117, %v1006
  %v1009 = vsel %vm278, %v119, %v1007
  %1010 = vrot.lane.b32.xlu0 %v1008, 111
  %v1011 = vpop.permute.xlu0 %1010
  %1012 = vrot.lane.b32.xlu0 %v1009, 111
  %v1013 = vpop.permute.xlu0 %1012
  %v1014 = vrot.slane %v1011, 4
  %v1015 = vrot.slane %v1013, 4
  %v1016 = vsel %vm133, %v1014, %v1011
  %v1017 = vsel %vm278, %v1014, %v1015
  %v1018 = vsel %vm133, %v1017, %v1013
  %v1022 = vmul.f32 %v1003, %v1016
  %v1023 = vmul.f32 %v1004, %v1018
  %v1024 = vmul.f32 %v1005, %v1015
  %1028 = vst [vmem:[#allocation1] ss:$2 sm:$0xff] %v1022
  %s1029 = scalar_lea.vmem [#allocation1], 16
  %1030 = vst [vmem:[%s1029] ss:$2 sm:$0xff] %v1023
  %s1031 = scalar_lea.vmem [#allocation1], 32
  %1032 = vst [vmem:[%s1031] ss:$2 sm:$0xff] %v1024
  %v1033 = vld.sshfl [vmem:[#allocation1] sm:$0xff pattern:$0x75316420]
  %v1034 = vld.sshfl [vmem:[#allocation1 + $0x8] sm:$0xff pattern:$0x75316420]
  %v1035 = vld.sshfl [vmem:[#allocation1 + $0x10] sm:$0xff pattern:$0x75316420]
  %v1036 = vld.sshfl [vmem:[#allocation1 + $0x18] sm:$0xff pattern:$0x75316420]
  %v1037 = vld.sshfl [vmem:[#allocation1 + $0x20] sm:$0xff pattern:$0x75316420]
  %v1043 = vpack.c.bf16 %v1034, %v1033
  %v1044 = vpack.c.bf16 %v1036, %v1035
  %v1045 = vpack.c.bf16 %v1037, %v1037
  %v1046 = vld [vmem:[#allocation3] sm:$0xff]
  %v1047 = vld [vmem:[#allocation3 + $0x8] sm:$0x3]
  %v1048 = vunpack.c.l.bf16 %v1046
  %v1049 = vunpack.c.h.bf16 %v1046
  %v1050 = vunpack.c.l.bf16 %v1047
  %v1051 = vrot.slane %v177, 4
  %v1052 = vrot.slane %v179, 4
  %v1053 = vsel %vm278, %v176, %v1051
  %v1054 = vsel %vm278, %v178, %v1052
  %1055 = vrot.lane.b32.xlu0 %v1053, 113
  %v1056 = vpop.permute.xlu0 %1055
  %1057 = vrot.lane.b32.xlu0 %v1054, 113
  %v1058 = vpop.permute.xlu0 %1057
  %v1059 = vrot.slane %v1056, 4
  %v1060 = vrot.slane %v1058, 4
  %v1061 = vsel %vm192, %v1059, %v1056
  %v1062 = vsel %vm278, %v1059, %v1060
  %v1063 = vsel %vm192, %v1062, %v1058
  %v1067 = vmul.f32 %v1048, %v1061
  %v1068 = vmul.f32 %v1049, %v1063
  %v1069 = vmul.f32 %v1050, %v1060
  %1073 = vst [vmem:[#allocation1] ss:$2 sm:$0xff] %v1067
  %s1074 = scalar_lea.vmem [#allocation1], 16
  %1075 = vst [vmem:[%s1074] ss:$2 sm:$0xff] %v1068
  %s1076 = scalar_lea.vmem [#allocation1], 32
  %1077 = vst [vmem:[%s1076] ss:$2 sm:$0xff] %v1069
  %v1078 = vld.sshfl [vmem:[#allocation1] sm:$0xff pattern:$0x75316420]
  %v1079 = vld.sshfl [vmem:[#allocation1 + $0x8] sm:$0xff pattern:$0x75316420]
  %v1080 = vld.sshfl [vmem:[#allocation1 + $0x10] sm:$0xff pattern:$0x75316420]
  %v1081 = vld.sshfl [vmem:[#allocation1 + $0x18] sm:$0xff pattern:$0x75316420]
  %v1082 = vld.sshfl [vmem:[#allocation1 + $0x20] sm:$0xff pattern:$0x75316420]
  %v1088 = vpack.c.bf16 %v1079, %v1078
  %v1089 = vpack.c.bf16 %v1081, %v1080
  %v1090 = vpack.c.bf16 %v1082, %v1082
  %v1094 = vunpack.c.l.b16 %v1043
  %v1095 = vunpack.c.h.b16 %v1043
  %v1096 = vunpack.c.l.b16 %v1044
  %v1097 = vunpack.c.h.b16 %v1044
  %v1098 = vunpack.c.l.b16 %v1045
  %v1099 = vpack.c.b16 %v1094, %v1094
  %v1100 = vpack.c.b16 %v1095, %v1095
  %v1101 = vpack.c.b16 %v1096, %v1096
  %v1102 = vpack.c.b16 %v1097, %v1097
  %v1103 = vpack.c.b16 %v1098, %v1098
  %s1105 = scalar_lea.vmem [#allocation1], 1
  %1106 = vst [vmem:[%s1105] ss:$4 sm:$0xff] %v1046
  %s1108 = scalar_lea.vmem [#allocation1], 33
  %1109 = vst [vmem:[%s1108] ss:$4 sm:$0xff] %v1047
  %v1110 = vld.sshfl [vmem:[#allocation1] sm:$0xff pattern:$0x73625140]
  %v1112 = vld.sshfl [vmem:[#allocation1 + $0x8] sm:$0xff pattern:$0x73625140]
  %v1114 = vld.sshfl [vmem:[#allocation1 + $0x10] sm:$0xff pattern:$0x73625140]
  %v1116 = vld.sshfl [vmem:[#allocation1 + $0x18] sm:$0xff pattern:$0x73625140]
  %v1118 = vld.sshfl [vmem:[#allocation1 + $0x20] sm:$0xff pattern:$0x73625140]
  %1120 = vrot.lane.b32.xlu0 %v1110, 127
  %v1121 = vpop.permute.xlu0 %1120
  %1122 = vrot.lane.b32.xlu0 %v1112, 127
  %v1123 = vpop.permute.xlu0 %1122
  %1124 = vrot.lane.b32.xlu0 %v1114, 127
  %v1125 = vpop.permute.xlu0 %1124
  %1126 = vrot.lane.b32.xlu0 %v1116, 127
  %v1127 = vpop.permute.xlu0 %1126
  %1128 = vrot.lane.b32.xlu0 %v1118, 127
  %v1129 = vpop.permute.xlu0 %1128
  %v1130 = vsel %vm245, %v1121, %v1123
  %v1131 = vsel %vm245, %v1123, %v1125
  %v1132 = vsel %vm245, %v1125, %v1127
  %v1133 = vsel %vm245, %v1127, %v1129
  %v1137 = vunpack.c.l.b16 %v1088
  %v1138 = vunpack.c.h.b16 %v1088
  %v1139 = vunpack.c.l.b16 %v1089
  %v1140 = vunpack.c.h.b16 %v1089
  %v1141 = vunpack.c.l.b16 %v1090
  %v1142 = vpack.c.b16 %v1137, %v1137
  %v1143 = vpack.c.b16 %v1138, %v1138
  %v1144 = vpack.c.b16 %v1139, %v1139
  %v1145 = vpack.c.b16 %v1140, %v1140
  %v1146 = vpack.c.b16 %v1141, %v1141
  %1147 = vrot.lane.b32.xlu0 %v1142, 126
  %v1148 = vpop.permute.xlu0 %1147
  %1149 = vrot.lane.b32.xlu0 %v1143, 126
  %v1150 = vpop.permute.xlu0 %1149
  %1151 = vrot.lane.b32.xlu0 %v1144, 126
  %v1152 = vpop.permute.xlu0 %1151
  %1153 = vrot.lane.b32.xlu0 %v1145, 126
  %v1154 = vpop.permute.xlu0 %1153
  %1155 = vrot.lane.b32.xlu0 %v1146, 126
  %v1156 = vpop.permute.xlu0 %1155
  %v1157 = vsel %vm273, %v1148, %v1150
  %v1158 = vsel %vm273, %v1150, %v1152
  %v1159 = vsel %vm273, %v1152, %v1154
  %v1160 = vsel %vm273, %v1154, %v1156
  %v1163 = vsel %vm990, %v1099, %v1130
  %v1166 = vsel %vm990, %v1100, %v1131
  %v1169 = vsel %vm990, %v1101, %v1132
  %v1172 = vsel %vm990, %v1102, %v1133
  %v1175 = vsel %vm990, %v1103, %v1129
  %v1177 = vsel %vm278, %v1163, %v1157
  %v1179 = vsel %vm278, %v1166, %v1158
  %v1181 = vsel %vm278, %v1169, %v1159
  %v1183 = vsel %vm278, %v1172, %v1160
  %v1185 = vsel %vm278, %v1175, %v1156
  %v1186 = vld [vmem:[%s6] sm:$0x3]
  %1192 = vrot.lane.b32.xlu0 %v1177, 17
  %v1193 = vpop.permute.xlu0 %1192
  %1194 = vrot.lane.b32.xlu0 %v1179, 17
  %v1195 = vpop.permute.xlu0 %1194
  %1196 = vrot.lane.b32.xlu0 %v1181, 17
  %v1197 = vpop.permute.xlu0 %1196
  %1198 = vrot.lane.b32.xlu0 %v1183, 17
  %v1199 = vpop.permute.xlu0 %1198
  %1200 = vrot.lane.b32.xlu0 %v1185, 17
  %v1201 = vpop.permute.xlu0 %1200
  %v1202 = vsel %vm320, %v1193, %v1195
  %v1203 = vsel %vm320, %v1195, %v1197
  %v1204 = vsel %vm320, %v1197, %v1199
  %v1205 = vsel %vm320, %v1199, %v1201
  %vm1206 = vcmask 97280
  %v1208 = vsel %vm1206, %v1186, 0
  %vm1210 = vcmask 1045504
  %v1212 = vsel %vm1210, %v1202, 0
  %v1215 = vsel %vm1210, %v1203, 0
  %v1218 = vsel %vm1210, %v1204, 0
  %v1221 = vsel %vm1210, %v1205, 0
  %1223 = vmatpush.bf16.msra.mxu0 0
  %1224 = vmatpush.bf16.msra.mxu0 0
  %1225 = vmatpush.bf16.msra.mxu0 0
  %1226 = vmatpush.bf16.msra.mxu0 0
  %1227 = vmatpush.bf16.msra.mxu0 0
  %1228 = vmatpush.bf16.msra.mxu0 0
  %1229 = vmatpush.bf16.msra.mxu0 0
  %1230 = vmatpush.bf16.msra.mxu0 %v1212
  %1231 = vmatmul.bf16.gmra.mxu0 %v1208
  %v1232 = vpop.f32.mrf.mxu0
  %v1233 = vadd.f32 0.0, %v1232
  %v1234 = vpop.f32.mrf.mxu0
  %1235 = vdwg.mxu0
  %1236 = vmatpush.bf16.msra.mxu0 0
  %1237 = vmatpush.bf16.msra.mxu0 0
  %1238 = vmatpush.bf16.msra.mxu0 0
  %1239 = vmatpush.bf16.msra.mxu0 0
  %1240 = vmatpush.bf16.msra.mxu0 0
  %1241 = vmatpush.bf16.msra.mxu0 0
  %1242 = vmatpush.bf16.msra.mxu0 0
  %1243 = vmatpush.bf16.msra.mxu0 %v1215
  %1244 = vmatmul.bf16.gmra.mxu0 %v1208
  %v1245 = vpop.f32.mrf.mxu0
  %v1246 = vadd.f32 0.0, %v1245
  %v1247 = vpop.f32.mrf.mxu0
  %1248 = vdwg.mxu0
  %1249 = vmatpush.bf16.msra.mxu0 0
  %1250 = vmatpush.bf16.msra.mxu0 0
  %1251 = vmatpush.bf16.msra.mxu0 0
  %1252 = vmatpush.bf16.msra.mxu0 0
  %1253 = vmatpush.bf16.msra.mxu0 0
  %1254 = vmatpush.bf16.msra.mxu0 0
  %1255 = vmatpush.bf16.msra.mxu0 0
  %1256 = vmatpush.bf16.msra.mxu0 %v1218
  %1257 = vmatmul.bf16.gmra.mxu0 %v1208
  %v1258 = vpop.f32.mrf.mxu0
  %v1259 = vadd.f32 0.0, %v1258
  %v1260 = vpop.f32.mrf.mxu0
  %1261 = vdwg.mxu0
  %1262 = vmatpush.bf16.msra.mxu0 0
  %1263 = vmatpush.bf16.msra.mxu0 0
  %1264 = vmatpush.bf16.msra.mxu0 0
  %1265 = vmatpush.bf16.msra.mxu0 0
  %1266 = vmatpush.bf16.msra.mxu0 0
  %1267 = vmatpush.bf16.msra.mxu0 0
  %1268 = vmatpush.bf16.msra.mxu0 0
  %1269 = vmatpush.bf16.msra.mxu0 %v1221
  %1270 = vmatmul.bf16.gmra.mxu0 %v1208
  %v1271 = vpop.f32.mrf.mxu0
  %v1272 = vadd.f32 0.0, %v1271
  %v1273 = vpop.f32.mrf.mxu0
  %1274 = vdwg.mxu0
  %v1275 = vmul.f32 %v1233, %v402
  %v1276 = vmul.f32 %v1246, %v403
  %v1277 = vmul.f32 %v1259, %v404
  %v1278 = vmul.f32 %v1272, %v405
  %v1279 = vld [vmem:[#allocation3] sm:$0xff]
  %v1280 = vld [vmem:[#allocation3 + $0x8] sm:$0x3]
  %v1281 = vunpack.c.l.bf16 %v1279
  %v1282 = vunpack.c.h.bf16 %v1279
  %v1283 = vunpack.c.l.bf16 %v1280
  %1284 = vrot.lane.b32.xlu0 %v1008, 127
  %v1285 = vpop.permute.xlu0 %1284
  %1286 = vrot.lane.b32.xlu0 %v1009, 127
  %v1287 = vpop.permute.xlu0 %1286
  %v1288 = vrot.slane %v1285, 4
  %v1289 = vrot.slane %v1287, 4
  %v1290 = vsel %vm422, %v1288, %v1285
  %v1291 = vsel %vm278, %v1288, %v1289
  %v1292 = vsel %vm422, %v1291, %v1287
  %v1296 = vmul.f32 %v1281, %v1290
  %v1297 = vmul.f32 %v1282, %v1292
  %v1298 = vmul.f32 %v1283, %v1289
  %1302 = vst [vmem:[#allocation1] ss:$2 sm:$0xff] %v1296
  %s1303 = scalar_lea.vmem [#allocation1], 16
  %1304 = vst [vmem:[%s1303] ss:$2 sm:$0xff] %v1297
  %s1305 = scalar_lea.vmem [#allocation1], 32
  %1306 = vst [vmem:[%s1305] ss:$2 sm:$0xff] %v1298
  %v1307 = vld.sshfl [vmem:[#allocation1] sm:$0xff pattern:$0x75316420]
  %v1308 = vld.sshfl [vmem:[#allocation1 + $0x8] sm:$0xff pattern:$0x75316420]
  %v1309 = vld.sshfl [vmem:[#allocation1 + $0x10] sm:$0xff pattern:$0x75316420]
  %v1310 = vld.sshfl [vmem:[#allocation1 + $0x18] sm:$0xff pattern:$0x75316420]
  %v1311 = vld.sshfl [vmem:[#allocation1 + $0x20] sm:$0xff pattern:$0x75316420]
  %v1317 = vpack.c.bf16 %v1308, %v1307
  %v1318 = vpack.c.bf16 %v1310, %v1309
  %v1319 = vpack.c.bf16 %v1311, %v1311
  %v1320 = vld [vmem:[#allocation3 + $0x2] sm:$0xff]
  %v1321 = vld [vmem:[#allocation3 + $0x2] sm:$0xff]
  %v1322 = vld [vmem:[#allocation3 + $0xa] sm:$0x3]
  %v1323 = vunpack.c.l.bf16 %v1321
  %v1324 = vunpack.c.h.bf16 %v1321
  %v1325 = vunpack.c.l.bf16 %v1322
  %1326 = vrot.lane.b32.xlu0 %v1053, 1
  %v1327 = vpop.permute.xlu0 %1326
  %1328 = vrot.lane.b32.xlu0 %v1054, 1
  %v1329 = vpop.permute.xlu0 %1328
  %v1330 = vrot.slane %v1327, 4
  %v1331 = vrot.slane %v1329, 4
  %v1332 = vsel %vm457, %v1330, %v1327
  %v1333 = vsel %vm278, %v1330, %v1331
  %v1334 = vsel %vm457, %v1333, %v1329
  %v1338 = vmul.f32 %v1323, %v1332
  %v1339 = vmul.f32 %v1324, %v1334
  %v1340 = vmul.f32 %v1325, %v1331
  %1344 = vst [vmem:[#allocation1] ss:$2 sm:$0xff] %v1338
  %s1345 = scalar_lea.vmem [#allocation1], 16
  %1346 = vst [vmem:[%s1345] ss:$2 sm:$0xff] %v1339
  %s1347 = scalar_lea.vmem [#allocation1], 32
  %1348 = vst [vmem:[%s1347] ss:$2 sm:$0xff] %v1340
  %v1349 = vld.sshfl [vmem:[#allocation1] sm:$0xff pattern:$0x75316420]
  %v1350 = vld.sshfl [vmem:[#allocation1 + $0x8] sm:$0xff pattern:$0x75316420]
  %v1351 = vld.sshfl [vmem:[#allocation1 + $0x10] sm:$0xff pattern:$0x75316420]
  %v1352 = vld.sshfl [vmem:[#allocation1 + $0x18] sm:$0xff pattern:$0x75316420]
  %v1353 = vld.sshfl [vmem:[#allocation1 + $0x20] sm:$0xff pattern:$0x75316420]
  %v1359 = vpack.c.bf16 %v1350, %v1349
  %v1360 = vpack.c.bf16 %v1352, %v1351
  %v1361 = vpack.c.bf16 %v1353, %v1353
  %v1365 = vunpack.c.l.b16 %v1317
  %v1366 = vunpack.c.h.b16 %v1317
  %v1367 = vunpack.c.l.b16 %v1318
  %v1368 = vunpack.c.h.b16 %v1318
  %v1369 = vunpack.c.l.b16 %v1319
  %v1370 = vpack.c.b16 %v1365, %v1365
  %v1371 = vpack.c.b16 %v1366, %v1366
  %v1372 = vpack.c.b16 %v1367, %v1367
  %v1373 = vpack.c.b16 %v1368, %v1368
  %v1374 = vpack.c.b16 %v1369, %v1369
  %s1376 = scalar_lea.vmem [#allocation1], 1
  %1377 = vst [vmem:[%s1376] ss:$4 sm:$0xff] %v1320
  %v1378 = vld.sshfl [vmem:[#allocation1] sm:$0xff pattern:$0x73625140]
  %v1380 = vld.sshfl [vmem:[#allocation1 + $0x8] sm:$0xff pattern:$0x73625140]
  %v1382 = vld.sshfl [vmem:[#allocation1 + $0x10] sm:$0xff pattern:$0x73625140]
  %v1384 = vld.sshfl [vmem:[#allocation1 + $0x18] sm:$0xff pattern:$0x73625140]
  %1386 = vrot.lane.b32.xlu0 %v1378, 127
  %v1387 = vpop.permute.xlu0 %1386
  %1388 = vrot.lane.b32.xlu0 %v1380, 127
  %v1389 = vpop.permute.xlu0 %1388
  %1390 = vrot.lane.b32.xlu0 %v1382, 127
  %v1391 = vpop.permute.xlu0 %1390
  %1392 = vrot.lane.b32.xlu0 %v1384, 127
  %v1393 = vpop.permute.xlu0 %1392
  %v1394 = vsel %vm245, %v1387, %v1389
  %v1395 = vsel %vm245, %v1389, %v1391
  %v1396 = vsel %vm245, %v1391, %v1393
  %v1400 = vunpack.c.l.b16 %v1359
  %v1401 = vunpack.c.h.b16 %v1359
  %v1402 = vunpack.c.l.b16 %v1360
  %v1403 = vunpack.c.h.b16 %v1360
  %v1404 = vunpack.c.l.b16 %v1361
  %v1405 = vpack.c.b16 %v1400, %v1400
  %v1406 = vpack.c.b16 %v1401, %v1401
  %v1407 = vpack.c.b16 %v1402, %v1402
  %v1408 = vpack.c.b16 %v1403, %v1403
  %v1409 = vpack.c.b16 %v1404, %v1404
  %1410 = vrot.lane.b32.xlu0 %v1405, 126
  %v1411 = vpop.permute.xlu0 %1410
  %1412 = vrot.lane.b32.xlu0 %v1406, 126
  %v1413 = vpop.permute.xlu0 %1412
  %1414 = vrot.lane.b32.xlu0 %v1407, 126
  %v1415 = vpop.permute.xlu0 %1414
  %1416 = vrot.lane.b32.xlu0 %v1408, 126
  %v1417 = vpop.permute.xlu0 %1416
  %1418 = vrot.lane.b32.xlu0 %v1409, 126
  %v1419 = vpop.permute.xlu0 %1418
  %v1420 = vsel %vm273, %v1411, %v1413
  %v1421 = vsel %vm273, %v1413, %v1415
  %v1422 = vsel %vm273, %v1415, %v1417
  %v1423 = vsel %vm273, %v1417, %v1419
  %v1426 = vsel %vm990, %v1370, %v1387
  %v1429 = vsel %vm990, %v1371, %v1394
  %v1432 = vsel %vm990, %v1372, %v1395
  %v1435 = vsel %vm990, %v1373, %v1396
  %v1438 = vsel %vm990, %v1374, %v1393
  %v1440 = vsel %vm278, %v1426, %v1411
  %v1442 = vsel %vm278, %v1429, %v1420
  %v1444 = vsel %vm278, %v1432, %v1421
  %v1446 = vsel %vm278, %v1435, %v1422
  %v1448 = vsel %vm278, %v1438, %v1423
  %s1449 = scalar_lea.vmem %s6, 2
  %v1450 = vld [vmem:[%s1449] sm:$0x3]
  %1456 = vrot.lane.b32.xlu0 %v1440, 1
  %v1457 = vpop.permute.xlu0 %1456
  %1458 = vrot.lane.b32.xlu0 %v1442, 1
  %v1459 = vpop.permute.xlu0 %1458
  %1460 = vrot.lane.b32.xlu0 %v1444, 1
  %v1461 = vpop.permute.xlu0 %1460
  %1462 = vrot.lane.b32.xlu0 %v1446, 1
  %v1463 = vpop.permute.xlu0 %1462
  %1464 = vrot.lane.b32.xlu0 %v1448, 1
  %v1465 = vpop.permute.xlu0 %1464
  %v1466 = vsel %vm577, %v1457, %v1459
  %v1467 = vsel %vm577, %v1459, %v1461
  %v1468 = vsel %vm577, %v1461, %v1463
  %v1469 = vsel %vm577, %v1463, %v1465
  %v1471 = vsel %vm1206, %v1450, 0
  %v1474 = vsel %vm1210, %v1466, 0
  %v1477 = vsel %vm1210, %v1467, 0
  %v1480 = vsel %vm1210, %v1468, 0
  %v1483 = vsel %vm1210, %v1469, 0
  %1485 = vmatpush.bf16.msra.mxu0 0
  %1486 = vmatpush.bf16.msra.mxu0 0
  %1487 = vmatpush.bf16.msra.mxu0 0
  %1488 = vmatpush.bf16.msra.mxu0 0
  %1489 = vmatpush.bf16.msra.mxu0 0
  %1490 = vmatpush.bf16.msra.mxu0 0
  %1491 = vmatpush.bf16.msra.mxu0 0
  %1492 = vmatpush.bf16.msra.mxu0 %v1474
  %1493 = vmatmul.bf16.gmra.mxu0 %v1471
  %v1494 = vpop.f32.mrf.mxu0
  %v1495 = vadd.f32 0.0, %v1494
  %v1496 = vpop.f32.mrf.mxu0
  %1497 = vdwg.mxu0
  %1498 = vmatpush.bf16.msra.mxu0 0
  %1499 = vmatpush.bf16.msra.mxu0 0
  %1500 = vmatpush.bf16.msra.mxu0 0
  %1501 = vmatpush.bf16.msra.mxu0 0
  %1502 = vmatpush.bf16.msra.mxu0 0
  %1503 = vmatpush.bf16.msra.mxu0 0
  %1504 = vmatpush.bf16.msra.mxu0 0
  %1505 = vmatpush.bf16.msra.mxu0 %v1477
  %1506 = vmatmul.bf16.gmra.mxu0 %v1471
  %v1507 = vpop.f32.mrf.mxu0
  %v1508 = vadd.f32 0.0, %v1507
  %v1509 = vpop.f32.mrf.mxu0
  %1510 = vdwg.mxu0
  %1511 = vmatpush.bf16.msra.mxu0 0
  %1512 = vmatpush.bf16.msra.mxu0 0
  %1513 = vmatpush.bf16.msra.mxu0 0
  %1514 = vmatpush.bf16.msra.mxu0 0
  %1515 = vmatpush.bf16.msra.mxu0 0
  %1516 = vmatpush.bf16.msra.mxu0 0
  %1517 = vmatpush.bf16.msra.mxu0 0
  %1518 = vmatpush.bf16.msra.mxu0 %v1480
  %1519 = vmatmul.bf16.gmra.mxu0 %v1471
  %v1520 = vpop.f32.mrf.mxu0
  %v1521 = vadd.f32 0.0, %v1520
  %v1522 = vpop.f32.mrf.mxu0
  %1523 = vdwg.mxu0
  %1524 = vmatpush.bf16.msra.mxu0 0
  %1525 = vmatpush.bf16.msra.mxu0 0
  %1526 = vmatpush.bf16.msra.mxu0 0
  %1527 = vmatpush.bf16.msra.mxu0 0
  %1528 = vmatpush.bf16.msra.mxu0 0
  %1529 = vmatpush.bf16.msra.mxu0 0
  %1530 = vmatpush.bf16.msra.mxu0 0
  %1531 = vmatpush.bf16.msra.mxu0 %v1483
  %1532 = vmatmul.bf16.gmra.mxu0 %v1471
  %v1533 = vpop.f32.mrf.mxu0
  %v1534 = vadd.f32 0.0, %v1533
  %v1535 = vpop.f32.mrf.mxu0
  %1536 = vdwg.mxu0
  %v1537 = vadd.f32 %v1275, %v1495
  %v1538 = vadd.f32 %v1276, %v1508
  %v1539 = vadd.f32 %v1277, %v1521
  %v1540 = vadd.f32 %v1278, %v1534
  %v1541 = vld [vmem:[#allocation3 + $0x2] sm:$0xff]
  %v1542 = vld [vmem:[#allocation3 + $0xa] sm:$0x3]
  %v1543 = vunpack.c.l.bf16 %v1541
  %v1544 = vunpack.c.h.bf16 %v1541
  %v1545 = vunpack.c.l.bf16 %v1542
  %1546 = vrot.lane.b32.xlu0 %v1008, 15
  %v1547 = vpop.permute.xlu0 %1546
  %1548 = vrot.lane.b32.xlu0 %v1009, 15
  %v1549 = vpop.permute.xlu0 %1548
  %v1550 = vrot.slane %v1547, 4
  %v1551 = vrot.slane %v1549, 4
  %v1552 = vsel %vm669, %v1550, %v1547
  %v1553 = vsel %vm278, %v1550, %v1551
  %v1554 = vsel %vm669, %v1553, %v1549
  %v1558 = vmul.f32 %v1543, %v1552
  %v1559 = vmul.f32 %v1544, %v1554
  %v1560 = vmul.f32 %v1545, %v1551
  %1564 = vst [vmem:[#allocation1] ss:$2 sm:$0xff] %v1558
  %s1565 = scalar_lea.vmem [#allocation1], 16
  %1566 = vst [vmem:[%s1565] ss:$2 sm:$0xff] %v1559
  %s1567 = scalar_lea.vmem [#allocation1], 32
  %1568 = vst [vmem:[%s1567] ss:$2 sm:$0xff] %v1560
  %v1569 = vld.sshfl [vmem:[#allocation1] sm:$0xff pattern:$0x75316420]
  %v1570 = vld.sshfl [vmem:[#allocation1 + $0x8] sm:$0xff pattern:$0x75316420]
  %v1571 = vld.sshfl [vmem:[#allocation1 + $0x10] sm:$0xff pattern:$0x75316420]
  %v1572 = vld.sshfl [vmem:[#allocation1 + $0x18] sm:$0xff pattern:$0x75316420]
  %v1573 = vld.sshfl [vmem:[#allocation1 + $0x20] sm:$0xff pattern:$0x75316420]
  %v1579 = vpack.c.bf16 %v1570, %v1569
  %v1580 = vpack.c.bf16 %v1572, %v1571
  %v1581 = vpack.c.bf16 %v1573, %v1573
  %v1582 = vld [vmem:[#allocation3 + $0x2] sm:$0xff]
  %v1583 = vld [vmem:[#allocation3 + $0xa] sm:$0x3]
  %v1584 = vunpack.c.l.bf16 %v1582
  %v1585 = vunpack.c.h.bf16 %v1582
  %v1586 = vunpack.c.l.bf16 %v1583
  %1587 = vrot.lane.b32.xlu0 %v1053, 17
  %v1588 = vpop.permute.xlu0 %1587
  %1589 = vrot.lane.b32.xlu0 %v1054, 17
  %v1590 = vpop.permute.xlu0 %1589
  %v1591 = vrot.slane %v1588, 4
  %v1592 = vrot.slane %v1590, 4
  %v1593 = vsel %vm694, %v1591, %v1588
  %v1594 = vsel %vm278, %v1591, %v1592
  %v1595 = vsel %vm694, %v1594, %v1590
  %v1599 = vmul.f32 %v1584, %v1593
  %v1600 = vmul.f32 %v1585, %v1595
  %v1601 = vmul.f32 %v1586, %v1592
  %1605 = vst [vmem:[#allocation1] ss:$2 sm:$0xff] %v1599
  %s1606 = scalar_lea.vmem [#allocation1], 16
  %1607 = vst [vmem:[%s1606] ss:$2 sm:$0xff] %v1600
  %s1608 = scalar_lea.vmem [#allocation1], 32
  %1609 = vst [vmem:[%s1608] ss:$2 sm:$0xff] %v1601
  %v1610 = vld.sshfl [vmem:[#allocation1] sm:$0xff pattern:$0x75316420]
  %v1611 = vld.sshfl [vmem:[#allocation1 + $0x8] sm:$0xff pattern:$0x75316420]
  %v1612 = vld.sshfl [vmem:[#allocation1 + $0x10] sm:$0xff pattern:$0x75316420]
  %v1613 = vld.sshfl [vmem:[#allocation1 + $0x18] sm:$0xff pattern:$0x75316420]
  %v1614 = vld.sshfl [vmem:[#allocation1 + $0x20] sm:$0xff pattern:$0x75316420]
  %v1620 = vpack.c.bf16 %v1611, %v1610
  %v1621 = vpack.c.bf16 %v1613, %v1612
  %v1622 = vpack.c.bf16 %v1614, %v1614
  %v1626 = vunpack.c.l.b16 %v1579
  %v1627 = vunpack.c.h.b16 %v1579
  %v1628 = vunpack.c.l.b16 %v1580
  %v1629 = vunpack.c.h.b16 %v1580
  %v1630 = vunpack.c.l.b16 %v1581
  %v1631 = vpack.c.b16 %v1626, %v1626
  %v1632 = vpack.c.b16 %v1627, %v1627
  %v1633 = vpack.c.b16 %v1628, %v1628
  %v1634 = vpack.c.b16 %v1629, %v1629
  %v1635 = vpack.c.b16 %v1630, %v1630
  %s1637 = scalar_lea.vmem [#allocation1], 1
  %1638 = vst [vmem:[%s1637] ss:$4 sm:$0xff] %v1582
  %s1640 = scalar_lea.vmem [#allocation1], 33
  %1641 = vst [vmem:[%s1640] ss:$4 sm:$0xff] %v1583
  %v1642 = vld.sshfl [vmem:[#allocation1] sm:$0xff pattern:$0x73625140]
  %v1644 = vld.sshfl [vmem:[#allocation1 + $0x8] sm:$0xff pattern:$0x73625140]
  %v1646 = vld.sshfl [vmem:[#allocation1 + $0x10] sm:$0xff pattern:$0x73625140]
  %v1648 = vld.sshfl [vmem:[#allocation1 + $0x18] sm:$0xff pattern:$0x73625140]
  %v1650 = vld.sshfl [vmem:[#allocation1 + $0x20] sm:$0xff pattern:$0x73625140]
  %1652 = vrot.lane.b32.xlu0 %v1642, 127
  %v1653 = vpop.permute.xlu0 %1652
  %1654 = vrot.lane.b32.xlu0 %v1644, 127
  %v1655 = vpop.permute.xlu0 %1654
  %1656 = vrot.lane.b32.xlu0 %v1646, 127
  %v1657 = vpop.permute.xlu0 %1656
  %1658 = vrot.lane.b32.xlu0 %v1648, 127
  %v1659 = vpop.permute.xlu0 %1658
  %1660 = vrot.lane.b32.xlu0 %v1650, 127
  %v1661 = vpop.permute.xlu0 %1660
  %v1662 = vsel %vm245, %v1653, %v1655
  %v1663 = vsel %vm245, %v1655, %v1657
  %v1664 = vsel %vm245, %v1657, %v1659
  %v1665 = vsel %vm245, %v1659, %v1661
  %v1669 = vunpack.c.l.b16 %v1620
  %v1670 = vunpack.c.h.b16 %v1620
  %v1671 = vunpack.c.l.b16 %v1621
  %v1672 = vunpack.c.h.b16 %v1621
  %v1673 = vunpack.c.l.b16 %v1622
  %v1674 = vpack.c.b16 %v1669, %v1669
  %v1675 = vpack.c.b16 %v1670, %v1670
  %v1676 = vpack.c.b16 %v1671, %v1671
  %v1677 = vpack.c.b16 %v1672, %v1672
  %v1678 = vpack.c.b16 %v1673, %v1673
  %1679 = vrot.lane.b32.xlu0 %v1674, 126
  %v1680 = vpop.permute.xlu0 %1679
  %1681 = vrot.lane.b32.xlu0 %v1675, 126
  %v1682 = vpop.permute.xlu0 %1681
  %1683 = vrot.lane.b32.xlu0 %v1676, 126
  %v1684 = vpop.permute.xlu0 %1683
  %1685 = vrot.lane.b32.xlu0 %v1677, 126
  %v1686 = vpop.permute.xlu0 %1685
  %1687 = vrot.lane.b32.xlu0 %v1678, 126
  %v1688 = vpop.permute.xlu0 %1687
  %v1689 = vsel %vm273, %v1680, %v1682
  %v1690 = vsel %vm273, %v1682, %v1684
  %v1691 = vsel %vm273, %v1684, %v1686
  %v1692 = vsel %vm273, %v1686, %v1688
  %v1695 = vsel %vm990, %v1631, %v1662
  %v1698 = vsel %vm990, %v1632, %v1663
  %v1701 = vsel %vm990, %v1633, %v1664
  %v1704 = vsel %vm990, %v1634, %v1665
  %v1707 = vsel %vm990, %v1635, %v1661
  %v1709 = vsel %vm278, %v1695, %v1689
  %v1711 = vsel %vm278, %v1698, %v1690
  %v1713 = vsel %vm278, %v1701, %v1691
  %v1715 = vsel %vm278, %v1704, %v1692
  %v1717 = vsel %vm278, %v1707, %v1688
  %s1718 = scalar_lea.vmem %s6, 4
  %v1719 = vld [vmem:[%s1718] sm:$0x3]
  %1725 = vrot.lane.b32.xlu0 %v1709, 113
  %v1726 = vpop.permute.xlu0 %1725
  %1727 = vrot.lane.b32.xlu0 %v1711, 113
  %v1728 = vpop.permute.xlu0 %1727
  %1729 = vrot.lane.b32.xlu0 %v1713, 113
  %v1730 = vpop.permute.xlu0 %1729
  %1731 = vrot.lane.b32.xlu0 %v1715, 113
  %v1732 = vpop.permute.xlu0 %1731
  %1733 = vrot.lane.b32.xlu0 %v1717, 113
  %v1734 = vpop.permute.xlu0 %1733
  %v1735 = vsel %vm820, %v1726, %v1728
  %v1736 = vsel %vm820, %v1728, %v1730
  %v1737 = vsel %vm820, %v1730, %v1732
  %v1738 = vsel %vm820, %v1732, %v1734
  %v1740 = vsel %vm1206, %v1719, 0
  %v1743 = vsel %vm1210, %v1735, 0
  %v1746 = vsel %vm1210, %v1736, 0
  %v1749 = vsel %vm1210, %v1737, 0
  %v1752 = vsel %vm1210, %v1738, 0
  %1754 = vmatpush.bf16.msra.mxu0 0
  %1755 = vmatpush.bf16.msra.mxu0 0
  %1756 = vmatpush.bf16.msra.mxu0 0
  %1757 = vmatpush.bf16.msra.mxu0 0
  %1758 = vmatpush.bf16.msra.mxu0 0
  %1759 = vmatpush.bf16.msra.mxu0 0
  %1760 = vmatpush.bf16.msra.mxu0 0
  %1761 = vmatpush.bf16.msra.mxu0 %v1743
  %1762 = vmatmul.bf16.gmra.mxu0 %v1740
  %v1763 = vpop.f32.mrf.mxu0
  %v1764 = vadd.f32 0.0, %v1763
  %v1765 = vpop.f32.mrf.mxu0
  %1766 = vdwg.mxu0
  %1767 = vmatpush.bf16.msra.mxu0 0
  %1768 = vmatpush.bf16.msra.mxu0 0
  %1769 = vmatpush.bf16.msra.mxu0 0
  %1770 = vmatpush.bf16.msra.mxu0 0
  %1771 = vmatpush.bf16.msra.mxu0 0
  %1772 = vmatpush.bf16.msra.mxu0 0
  %1773 = vmatpush.bf16.msra.mxu0 0
  %1774 = vmatpush.bf16.msra.mxu0 %v1746
  %1775 = vmatmul.bf16.gmra.mxu0 %v1740
  %v1776 = vpop.f32.mrf.mxu0
  %v1777 = vadd.f32 0.0, %v1776
  %v1778 = vpop.f32.mrf.mxu0
  %1779 = vdwg.mxu0
  %1780 = vmatpush.bf16.msra.mxu0 0
  %1781 = vmatpush.bf16.msra.mxu0 0
  %1782 = vmatpush.bf16.msra.mxu0 0
  %1783 = vmatpush.bf16.msra.mxu0 0
  %1784 = vmatpush.bf16.msra.mxu0 0
  %1785 = vmatpush.bf16.msra.mxu0 0
  %1786 = vmatpush.bf16.msra.mxu0 0
  %1787 = vmatpush.bf16.msra.mxu0 %v1749
  %1788 = vmatmul.bf16.gmra.mxu0 %v1740
  %v1789 = vpop.f32.mrf.mxu0
  %v1790 = vadd.f32 0.0, %v1789
  %v1791 = vpop.f32.mrf.mxu0
  %1792 = vdwg.mxu0
  %1793 = vmatpush.bf16.msra.mxu0 0
  %1794 = vmatpush.bf16.msra.mxu0 0
  %1795 = vmatpush.bf16.msra.mxu0 0
  %1796 = vmatpush.bf16.msra.mxu0 0
  %1797 = vmatpush.bf16.msra.mxu0 0
  %1798 = vmatpush.bf16.msra.mxu0 0
  %1799 = vmatpush.bf16.msra.mxu0 0
  %1800 = vmatpush.bf16.msra.mxu0 %v1752
  %1801 = vmatmul.bf16.gmra.mxu0 %v1740
  %v1802 = vpop.f32.mrf.mxu0
  %v1803 = vadd.f32 0.0, %v1802
  %v1804 = vpop.f32.mrf.mxu0
  %1805 = vdwg.mxu0
  %v1806 = vmul.f32 %v1764, %v901
  %v1807 = vmul.f32 %v1777, %v902
  %v1808 = vmul.f32 %v1790, %v903
  %v1809 = vmul.f32 %v1803, %v904
  %v1810 = vadd.f32 %v1537, %v1806
  %v1811 = vadd.f32 %v1538, %v1807
  %v1812 = vadd.f32 %v1539, %v1808
  %v1813 = vadd.f32 %v1540, %v1809
  %v1814 = vsel %vm278, %v1810, 0.0
  %v1815 = vsel %vm278, %v1811, 0.0
  %v1816 = vadd.f32 %v1814, %v1815
  %v1817 = vsel %vm278, %v1812, 0.0
  %v1818 = vadd.f32 %v1816, %v1817
  %v1819 = vsel %vm278, %v1813, 0.0
  %v1820 = vadd.f32 %v1818, %v1819
  %1821 = vadd.xlane.f32.xlu0 %v1820
  %v1822 = vpop.xlane.xlu0 %1821
  %v1823 = vmul.f32 %v1822, 0.001953125
  %v1824 = vsub.f32 %v1810, %v1823
  %v1825 = vsub.f32 %v1811, %v1823
  %v1826 = vsub.f32 %v1812, %v1823
  %v1827 = vsub.f32 %v1813, %v1823
  %v1828 = vmul.f32 %v1824, %v1824
  %v1829 = vmul.f32 %v1825, %v1825
  %v1830 = vmul.f32 %v1826, %v1826
  %v1831 = vmul.f32 %v1827, %v1827
  %v1832 = vsel %vm278, %v1828, 0.0
  %v1833 = vsel %vm278, %v1829, 0.0
  %v1834 = vadd.f32 %v1832, %v1833
  %v1835 = vsel %vm278, %v1830, 0.0
  %v1836 = vadd.f32 %v1834, %v1835
  %v1837 = vsel %vm278, %v1831, 0.0
  %v1838 = vadd.f32 %v1836, %v1837
  %1839 = vadd.xlane.f32.xlu0 %v1838
  %v1840 = vpop.xlane.xlu0 %1839
  %v1841 = vmul.f32 %v1840, 0.001953125
  %v1842 = vld [vmem:[%s7] sm:$0xf]
  %v1843 = vadd.f32 %v1841, 1e-05
  %v1844 = vrsqrt.pop %v1843
  %v1845 = vmul.f32 %v1844, %v1843
  %v1846 = vmul.f32 %v1845, %v1844
  %v1847 = vmul.f32 0.5, %v1846
  %v1848 = vsub.f32 1.5, %v1847
  %v1849 = vmul.f32 %v1844, %v1848
  %vm1850 = vweird.f32 %v1843
  %vm1851 = vweird.f32 %v1844
  %vm1852 = vmor %vm1850, %vm1851
  %v1853 = vsel %vm1852, %v1844, %v1849
  %v1854 = vmul.f32 %v1842, %v1853
  %1856 = vset.pattern.permute.xlu0 0
  %1857 = vperm.xlu0 %1856, %v1854
  %v1858 = vpop.permute.xlu0 %1857
  %v1860 = vmul.f32 %v1824, %v1858
  %v1861 = vmul.f32 %v1825, %v1858
  %v1862 = vmul.f32 %v1826, %v1858
  %v1863 = vmul.f32 %v1827, %v1858
  %v1864 = vld [vmem:[%s8] sm:$0xf]
  %1866 = vset.pattern.permute.xlu0 0
  %1867 = vperm.xlu0 %1866, %v1864
  %v1868 = vpop.permute.xlu0 %1867
  %v1870 = vadd.f32 %v1860, %v1868
  %v1871 = vadd.f32 %v1861, %v1868
  %v1872 = vadd.f32 %v1862, %v1868
  %v1873 = vadd.f32 %v1863, %v1868
  %v1874 = vmax.f32 %v1870, 0.0
  %v1875 = vmax.f32 %v1871, 0.0
  %v1876 = vmax.f32 %v1872, 0.0
  %v1877 = vmax.f32 %v1873, 0.0
  %v1882 = vrot.slane %v1875, 4
  %v1883 = vrot.slane %v1877, 4
  %v1884 = vsel %vm278, %v1874, %v1882
  %v1885 = vsel %vm278, %v1876, %v1883
  %1888 = vst [vmem:[%s9] sm:$0xff] %v1884
  %1889 = vst [vmem:[%s9 + $0x8] sm:$0xff] %v1885
  // Predicated region
  $region38: #{_lambda_.1} parent=0 // pred_check
    _
  $region39: #{_lambda_.1} parent=0 // pred_check_branch
    %1891 = sbr.rel (0) target = $region41
  $region40: #{_lambda_.1} parent=0 // pred_region
    _
  $region41: #{_lambda_.1} parent=0 // pred_fallthru
    _
  // Predicated region
  $region42: #{_lambda_.1} parent=0 // pred_check
    _
  $region43: #{_lambda_.1} parent=0 // pred_check_branch
    %1893 = sbr.rel (0) target = $region45
  $region44: #{_lambda_.1} parent=0 // pred_region
    _
  $region45: #{_lambda_.1} parent=0 // pred_fallthru
    _

</llo_original>
